<compile_context>
chip_gen: v7x
topology: tpu7x:2x2x1
jax: 0.10.0
libtpu: 0.0.40
codegen_flags: <defaults>
</compile_context>

<pallas_src>
import numpy as np
import jax
import jax.numpy as jnp
from jax.experimental import pallas as pl
from jax.experimental.pallas import tpu as pltpu


# -----------------------------------------------------------------------------
# Kernel 1: fused neighbor embedding over the flattened neighbor table.
#   out[:, 0:h]  = relu(cat([relu(W1(att)), e_s, e_r]) @ W3 + b3)   (embeds)
#   out[:, h:2h] = relu(cat([e_s, e_r]) @ W4 + b4)                  (embeds_static)
# W3/W4 are host-packed into one [3h, 2h] weight (single MXU push per tile).
# -----------------------------------------------------------------------------
def _neighbor_embed_kernel(att_ref, es_ref, er_ref,
                           w1_ref, b1_ref, wp_ref, bp_ref,
                           out_ref):
    h = es_ref.shape[1]
    A = att_ref.shape[1]
    att = att_ref[...]
    # relu(att @ W1 + b1): K = num_att is tiny -> VPU broadcast-FMAs (MXU stays free).
    x1 = jnp.broadcast_to(b1_ref[...], (att.shape[0], h))
    for k in range(A):
        x1 = x1 + att[:, k:k + 1] * w1_ref[k:k + 1, :]
    e_att = jnp.maximum(x1, 0.0)
    # One packed MXU matmul: [e_att | e_s | e_r] @ Wp[3h, 2h] + bp.
    x = jnp.concatenate([e_att, es_ref[...], er_ref[...]], axis=1)      # [tile, 3h]
    y = jnp.dot(x, wp_ref[...], preferred_element_type=jnp.float32) + bp_ref[...]
    out_ref[...] = jnp.maximum(y, 0.0)                                  # [tile, 2h]


# -----------------------------------------------------------------------------
# Kernel 2: vectorized segment mean + sequence assembly.
# Grid = (subject_block, span_chunk). Each subject-block owns a uniform padded
# span of the flattened neighbor table; segment sums for all SB*L rows of the
# block are computed as one masked [SB*L, CHUNK] x [CHUNK, 2h] MXU matmul per
# span chunk and accumulated in VMEM scratch. The final chunk assembles:
#   att_seq[i, l] = cat([relu(W1(self_att[i,l])), e_s[i], mean(embeds)])
#   s_seq[i, l]   = cat([e_s[i], e_r[i], mean(embeds_static)])
# Padded (invalid) rows have inv_len == 0 and come out as zeros.
# -----------------------------------------------------------------------------
def _segmean_assemble_kernel(start_ref, cnt_ref, invl_ref,              # [SB, L, 1]
                             satt_ref, se_ref, sr_ref,                  # [SB,L,A], [SB,h], [SB,h]
                             emb_ref,                                   # [CHUNK, 2h] span chunk
                             w1_ref, b1_ref,                            # weights
                             s_seq_ref, att_seq_ref,                    # outputs [SB, L, 3h]
                             acc_ref):                                  # scratch [SB*L, 2h]
    SB, L, A = satt_ref.shape
    h = se_ref.shape[1]
    CHUNK = emb_ref.shape[0]
    c = pl.program_id(1)

    @pl.when(c == 0)
    def _():
        acc_ref[...] = jnp.zeros_like(acc_ref)

    # Masked segment-sum for this span chunk: one MXU push, fully vectorized.
    start = start_ref[...]                                              # int32 [SB, L, 1]
    cnt = cnt_ref[...]
    col = jax.lax.broadcasted_iota(jnp.int32, (SB, L, CHUNK), 2) + c * CHUNK
    mask = jnp.logical_and(col >= start, col < start + cnt).astype(jnp.float32)
    acc_ref[...] += jnp.dot(mask.reshape(SB * L, CHUNK), emb_ref[...],
                            preferred_element_type=jnp.float32)

    @pl.when(c == pl.num_programs(1) - 1)
    def _():
        # relu(W1(self_att)) for the whole block: K = num_att broadcast-FMAs (VPU).
        satt = satt_ref[...]                                            # [SB, L, A]
        x1 = jnp.broadcast_to(jnp.reshape(b1_ref[...], (1, 1, h)), (SB, L, h))
        for k in range(A):
            x1 = x1 + satt[:, :, k:k + 1] * jnp.reshape(w1_ref[k:k + 1, :], (1, 1, h))
        e_self_att = jnp.maximum(x1, 0.0)                               # [SB, L, h]

        invl = invl_ref[...]                                            # [SB, L, 1] (0 => padded row)
        valid = (invl > 0.0).astype(jnp.float32)
        mean = acc_ref[...].reshape(SB, L, 2 * h) * invl                # zero for padded rows
        se = jnp.reshape(se_ref[...], (SB, 1, h)) * valid               # [SB, L, h]
        sr = jnp.reshape(sr_ref[...], (SB, 1, h)) * valid

        # Block-granular lane-slice stores (once per block, no per-row stores).
        att_seq_ref[:, :, 0:h] = e_self_att * valid
        att_seq_ref[:, :, h:2 * h] = se
        att_seq_ref[:, :, 2 * h:3 * h] = mean[:, :, 0:h]
        s_seq_ref[:, :, 0:h] = se
        s_seq_ref[:, :, h:2 * h] = sr
        s_seq_ref[:, :, 2 * h:3 * h] = mean[:, :, h:2 * h]


# -----------------------------------------------------------------------------
# Host-side ragged-history flattening (mirrors get_sorted_s_r_embed), laid out
# per subject-block with a uniform padded span so kernel 2 can stream each
# block's neighbor rows with a plain BlockSpec (no resident table, no gathers).
# -----------------------------------------------------------------------------
def _prepare(s_hist, rel_hist, att_s_hist, self_att_s_hist, s, r,
             num_att, seq_len, chunk, subj_block):
    lens = np.array([len(x) for x in s_hist], dtype=np.int64)
    s_idx = np.argsort(-lens, kind="stable")
    s_len = lens[s_idx]
    S = int((s_len > 0).sum())
    s_len_non_zero = s_len[:S]
    L = seq_len
    SB = subj_block
    S_pad = max(SB, ((S + SB - 1) // SB) * SB)
    num_blocks = S_pad // SB

    # Pass 1: per-block neighbor totals -> uniform padded span (multiple of chunk).
    block_tot = np.zeros((num_blocks,), np.int64)
    for i in range(S):
        j = int(s_idx[i])
        b = i // SB
        for t in range(min(len(s_hist[j]), L)):
            block_tot[b] += len(s_hist[j][t])
    max_span = int(block_tot.max()) if S > 0 else 0
    span_pad = max(chunk, ((max_span + chunk - 1) // chunk) * chunk)
    N_total = num_blocks * span_pad

    seg_start = np.zeros((S_pad, L), np.int32)     # relative to block base
    seg_count = np.zeros((S_pad, L), np.int32)
    inv_len = np.zeros((S_pad, L), np.float32)
    self_att_pad = np.zeros((S_pad, L, num_att), np.float32)
    att_flat = np.zeros((N_total, num_att), np.float32)
    s_flat_idx = np.zeros((N_total,), np.int32)
    r_flat_idx = np.zeros((N_total,), np.int32)

    cursor = np.zeros((num_blocks,), np.int64)
    for i in range(S):
        j = int(s_idx[i])
        b = i // SB
        hl = min(len(s_hist[j]), L)
        sa = np.asarray(self_att_s_hist[j], np.float32).reshape(-1, num_att)
        self_att_pad[i, :hl] = sa[:hl]
        for t in range(hl):
            neighs = np.asarray(s_hist[j][t], np.int64).reshape(-1)
            n = int(neighs.shape[0])
            pos = b * span_pad + int(cursor[b])
            seg_start[i, t] = int(cursor[b])
            seg_count[i, t] = n
            inv_len[i, t] = 1.0 / float(n)
            s_flat_idx[pos:pos + n] = neighs.astype(np.int32)
            r_flat_idx[pos:pos + n] = np.asarray(rel_hist[j][t], np.int64).reshape(-1).astype(np.int32)
            att_flat[pos:pos + n] = np.asarray(att_s_hist[j][t], np.float32).reshape(-1, num_att)
            cursor[b] += n
    assert int(cursor.max(initial=0)) <= span_pad  # spans fit by construction (no OOB masks)

    s_tem = np.zeros((S_pad,), np.int32)
    r_tem = np.zeros((S_pad,), np.int32)
    s_tem[:S] = np.asarray(s, np.int64)[s_idx[:S]].astype(np.int32)
    r_tem[:S] = np.asarray(r, np.int64)[s_idx[:S]].astype(np.int32)

    return dict(att_flat=att_flat, s_flat_idx=s_flat_idx, r_flat_idx=r_flat_idx,
                seg_start=seg_start, seg_count=seg_count, inv_len=inv_len,
                self_att_pad=self_att_pad, s_tem=s_tem, r_tem=r_tem,
                s_len_non_zero=s_len_non_zero, s_idx=s_idx,
                span_pad=span_pad, subj_block=SB, num_blocks=num_blocks)


# -----------------------------------------------------------------------------
# Forward wrapper (MeanAggregator.forward equivalent).
# -----------------------------------------------------------------------------
def mean_aggregator_forward(s_hist, rel_hist, att_s_hist, self_att_s_hist, s, r,
                            ent_embeds, rel_embeds, params, h_dim, num_att, seq_len,
                            chunk=512, subj_block=32):
    prep = _prepare(s_hist, rel_hist, att_s_hist, self_att_s_hist, s, r,
                    num_att, seq_len, chunk, subj_block)
    W1, b1, W3, b3, W4, b4 = (params[k] for k in ("W1", "b1", "W3", "b3", "W4", "b4"))
    h, A, L = h_dim, num_att, seq_len

    # Host-pack W3/W4 into one [3h, 2h] matmul operand (+ packed bias).
    Wp = jnp.zeros((3 * h, 2 * h), jnp.float32)
    Wp = Wp.at[:, 0:h].set(W3)
    Wp = Wp.at[h:3 * h, h:2 * h].set(W4)
    bp = jnp.concatenate([b3, b4], axis=1)

    # ---- Kernel 1: fused neighbor embeddings over the flattened neighbor table ----
    att_flat = jnp.asarray(prep["att_flat"])
    # TODO(synk): the ent/rel row gathers could be fused into kernel 1 (in-kernel take
    # on VMEM-resident tables) to halve HBM traffic; kept as XLA gathers for robustness.
    es_flat = ent_embeds[jnp.asarray(prep["s_flat_idx"])]
    er_flat = rel_embeds[jnp.asarray(prep["r_flat_idx"])]
    N_total = att_flat.shape[0]
    tile_n = chunk

    k1_cost = pl.CostEstimate(
        flops=int(N_total) * (2 * 3 * h * 2 * h + 2 * A * h),
        transcendentals=0,
        bytes_accessed=int(N_total) * (A + 4 * h) * 4 + (3 * h * 2 * h + A * h + 3 * h) * 4)

    emb_flat = pl.pallas_call(
        _neighbor_embed_kernel,
        grid=(N_total // tile_n,),
        in_specs=[
            pl.BlockSpec((tile_n, A), lambda i: (i, 0)),
            pl.BlockSpec((tile_n, h), lambda i: (i, 0)),
            pl.BlockSpec((tile_n, h), lambda i: (i, 0)),
            pl.BlockSpec((A, h), lambda i: (0, 0)),
            pl.BlockSpec((1, h), lambda i: (0, 0)),
            pl.BlockSpec((3 * h, 2 * h), lambda i: (0, 0)),
            pl.BlockSpec((1, 2 * h), lambda i: (0, 0)),
        ],
        out_specs=pl.BlockSpec((tile_n, 2 * h), lambda i: (i, 0)),
        out_shape=jax.ShapeDtypeStruct((N_total, 2 * h), jnp.float32),
        compiler_params=pltpu.CompilerParams(dimension_semantics=("parallel",)),
        cost_estimate=k1_cost,
    )(att_flat, es_flat, er_flat, W1, b1, Wp, bp)

    # ---- Kernel 2: masked-matmul segment mean + sequence assembly ----
    seg_start = jnp.asarray(prep["seg_start"])[:, :, None]     # [S_pad, L, 1] int32
    seg_count = jnp.asarray(prep["seg_count"])[:, :, None]
    inv_len = jnp.asarray(prep["inv_len"])[:, :, None]          # [S_pad, L, 1] f32
    self_att_pad = jnp.asarray(prep["self_att_pad"])
    self_e = ent_embeds[jnp.asarray(prep["s_tem"])]
    self_r = rel_embeds[jnp.asarray(prep["r_tem"])]
    S_pad = self_att_pad.shape[0]
    SB = subj_block
    num_blocks = S_pad // SB
    span_pad = prep["span_pad"]
    num_chunks = span_pad // chunk

    k2_cost = pl.CostEstimate(
        flops=int(num_blocks) * int(num_chunks) * (2 * SB * L * chunk * 2 * h),
        transcendentals=0,
        bytes_accessed=int(N_total) * 2 * h * 4 + int(S_pad) * L * (2 * 3 * h + A + 3) * 4)

    s_seq_p, att_seq_p = pl.pallas_call(
        _segmean_assemble_kernel,
        grid=(num_blocks, num_chunks),
        in_specs=[
            pl.BlockSpec((SB, L, 1), lambda b, c: (b, 0, 0)),            # seg_start (rel)
            pl.BlockSpec((SB, L, 1), lambda b, c: (b, 0, 0)),            # seg_count
            pl.BlockSpec((SB, L, 1), lambda b, c: (b, 0, 0)),            # 1/len
            pl.BlockSpec((SB, L, A), lambda b, c: (b, 0, 0)),            # self_att
            pl.BlockSpec((SB, h), lambda b, c: (b, 0)),                  # ent_embeds[s_tem]
            pl.BlockSpec((SB, h), lambda b, c: (b, 0)),                  # rel_embeds[r_tem]
            pl.BlockSpec((chunk, 2 * h),
                         lambda b, c: (b * num_chunks + c, 0)),          # emb span chunk
            pl.BlockSpec((A, h), lambda b, c: (0, 0)),                   # W1
            pl.BlockSpec((1, h), lambda b, c: (0, 0)),                   # b1
        ],
        out_specs=[
            pl.BlockSpec((SB, L, 3 * h), lambda b, c: (b, 0, 0)),
            pl.BlockSpec((SB, L, 3 * h), lambda b, c: (b, 0, 0)),
        ],
        out_shape=(jax.ShapeDtypeStruct((S_pad, L, 3 * h), jnp.float32),
                   jax.ShapeDtypeStruct((S_pad, L, 3 * h), jnp.float32)),
        scratch_shapes=[pltpu.VMEM((SB * L, 2 * h), jnp.float32)],
        compiler_params=pltpu.CompilerParams(
            dimension_semantics=("parallel", "arbitrary")),
        cost_estimate=k2_cost,
    )(seg_start, seg_count, inv_len, self_att_pad, self_e, self_r, emb_flat, W1, b1)

    S = int(prep["s_len_non_zero"].shape[0])
    # TODO(synk): nn.Dropout applied as identity (eval-mode); stochastic training dropout not modeled.
    # TODO(synk): torch pack_padded_sequence has no JAX equivalent; returning padded tensors + lengths.
    return s_seq_p[:S], att_seq_p[:S], prep["s_len_non_zero"], prep


# -----------------------------------------------------------------------------
# Pure-numpy reference (same semantics) for correctness checking.
# -----------------------------------------------------------------------------
def _reference(prep, ent_embeds, rel_embeds, params, h_dim, num_att, seq_len):
    relu = lambda x: np.maximum(x, 0.0)
    W1, b1, W3, b3, W4, b4 = (np.asarray(params[k])
                              for k in ("W1", "b1", "W3", "b3", "W4", "b4"))
    ent = np.asarray(ent_embeds)
    rel = np.asarray(rel_embeds)
    att = prep["att_flat"]
    es = ent[prep["s_flat_idx"]]
    er = rel[prep["r_flat_idx"]]
    e_att = relu(att @ W1 + b1)
    embeds = relu(np.concatenate([e_att, es, er], axis=1) @ W3 + b3)
    embeds_static = relu(np.concatenate([es, er], axis=1) @ W4 + b4)
    S = int(prep["s_len_non_zero"].shape[0])
    L, h = seq_len, h_dim
    SB = prep["subj_block"]
    span_pad = prep["span_pad"]
    s_seq = np.zeros((S, L, 3 * h), np.float32)
    att_seq = np.zeros((S, L, 3 * h), np.float32)
    for i in range(S):
        se = ent[prep["s_tem"][i]]
        sr = rel[prep["r_tem"][i]]
        base = (i // SB) * span_pad
        for l in range(L):
            c = int(prep["seg_count"][i, l])
            if c == 0:
                continue
            a0 = base + int(prep["seg_start"][i, l])
            m = embeds[a0:a0 + c].mean(axis=0)
            ms = embeds_static[a0:a0 + c].mean(axis=0)
            esa = relu(prep["self_att_pad"][i, l] @ W1 + b1).reshape(-1)
            att_seq[i, l] = np.concatenate([esa, se, m])
            s_seq[i, l] = np.concatenate([se, sr, ms])
    return s_seq, att_seq


if __name__ == "__main__":
    h_dim, num_att, seq_len = 32, 4, 8
    num_ents, num_rels = 16, 8
    B = 6

    # Deterministic dense parameters (synthetic init).
    keys = jax.random.split(jax.random.PRNGKey(0), 8)
    ent_embeds = 0.1 * jax.random.normal(keys[0], (num_ents, h_dim), jnp.float32)
    rel_embeds = 0.1 * jax.random.normal(keys[1], (num_rels, h_dim), jnp.float32)
    params = dict(
        W1=0.1 * jax.random.normal(keys[2], (num_att, h_dim), jnp.float32),
        b1=0.1 * jax.random.normal(keys[3], (1, h_dim), jnp.float32),
        W3=0.1 * jax.random.normal(keys[4], (3 * h_dim, h_dim), jnp.float32),
        b3=0.1 * jax.random.normal(keys[5], (1, h_dim), jnp.float32),
        W4=0.1 * jax.random.normal(keys[6], (2 * h_dim, h_dim), jnp.float32),
        b4=0.1 * jax.random.normal(keys[7], (1, h_dim), jnp.float32),
    )

    # Deterministic ragged histories (host-side python lists, as in DArtNet).
    rng = np.random.RandomState(0)
    hist_lens = [3, 0, 5, 2, 8, 1]  # one subject with empty history
    s_hist, rel_hist, att_s_hist, self_att_s_hist = [], [], [], []
    for hl in hist_lens:
        sh, rh, ah, sah = [], [], [], []
        for _ in range(hl):
            n = int(rng.randint(1, 4))
            sh.append(list(rng.randint(0, num_ents, n)))
            rh.append(list(rng.randint(0, num_rels, n)))
            ah.append(rng.rand(n, num_att).astype(np.float32))
            sah.append(rng.rand(num_att).astype(np.float32))
        s_hist.append(sh); rel_hist.append(rh)
        att_s_hist.append(ah); self_att_s_hist.append(sah)
    s = rng.randint(0, num_ents, B)
    r = rng.randint(0, num_rels, B)

    s_seq, att_seq, s_len_non_zero, prep = mean_aggregator_forward(
        s_hist, rel_hist, att_s_hist, self_att_s_hist, s, r,
        ent_embeds, rel_embeds, params, h_dim, num_att, seq_len,
        chunk=512, subj_block=32)
    jax.block_until_ready((s_seq, att_seq))

    s_ref, att_ref = _reference(prep, ent_embeds, rel_embeds, params,
                                h_dim, num_att, seq_len)
    assert np.allclose(np.asarray(s_seq), s_ref, atol=1e-4, rtol=1e-4)
    assert np.allclose(np.asarray(att_seq), att_ref, atol=1e-4, rtol=1e-4)
    print("KERNEL_OK")
</pallas_src>

<mosaic_0001>
module attributes {stable_mosaic.version = 11 : i64} {
  func.func @_neighbor_embed_kernel(%arg0: i32, %arg1: memref<512x4xf32, #tpu.memory_space<vmem>>, %arg2: memref<512x32xf32, #tpu.memory_space<vmem>>, %arg3: memref<512x32xf32, #tpu.memory_space<vmem>>, %arg4: memref<4x32xf32, #tpu.memory_space<vmem>>, %arg5: memref<1x32xf32, #tpu.memory_space<vmem>>, %arg6: memref<96x64xf32, #tpu.memory_space<vmem>>, %arg7: memref<1x64xf32, #tpu.memory_space<vmem>>, %arg8: memref<512x64xf32, #tpu.memory_space<vmem>>) attributes {dimension_semantics = [#tpu.dimension_semantics<parallel>], iteration_bounds = array<i64: 1>, scalar_prefetch = 0 : i64, scratch_operands = 0 : i64, tpu.core_type = #tpu.core_type<tc>, window_params = [{transform_indices = @transform_0, window_bounds = array<i64: 512, 4>}, {transform_indices = @transform_1, window_bounds = array<i64: 512, 32>}, {transform_indices = @transform_2, window_bounds = array<i64: 512, 32>}, {pipeline_mode = #tpu.pipeline_mode<synchronous>, transform_indices = @transform_3, window_bounds = array<i64: 4, 32>}, {pipeline_mode = #tpu.pipeline_mode<synchronous>, transform_indices = @transform_4, window_bounds = array<i64: 1, 32>}, {pipeline_mode = #tpu.pipeline_mode<synchronous>, transform_indices = @transform_5, window_bounds = array<i64: 96, 64>}, {pipeline_mode = #tpu.pipeline_mode<synchronous>, transform_indices = @transform_6, window_bounds = array<i64: 1, 64>}, {transform_indices = @transform_7, window_bounds = array<i64: 512, 64>}]} {
    %c0 = arith.constant 0 : index
    %c0_0 = arith.constant 0 : index
    %0 = vector.load %arg1[%c0, %c0_0] : memref<512x4xf32, #tpu.memory_space<vmem>>, vector<512x4xf32>
    %c0_1 = arith.constant 0 : index
    %c0_2 = arith.constant 0 : index
    %1 = vector.load %arg5[%c0_1, %c0_2] : memref<1x32xf32, #tpu.memory_space<vmem>>, vector<1x32xf32>
    %2 = vector.shape_cast %1 : vector<1x32xf32> to vector<1x32xf32>
    %3 = vector.broadcast %2 : vector<1x32xf32> to vector<512x32xf32>
    %4 = vector.extract_strided_slice %0 {offsets = [0, 0], sizes = [512, 1], strides = [1, 1]} : vector<512x4xf32> to vector<512x1xf32>
    %c0_3 = arith.constant 0 : index
    %c0_4 = arith.constant 0 : index
    %5 = vector.load %arg4[%c0_3, %c0_4] : memref<4x32xf32, #tpu.memory_space<vmem>>, vector<1x32xf32>
    %6 = vector.broadcast %4 : vector<512x1xf32> to vector<512x32xf32>
    %7 = vector.broadcast %5 : vector<1x32xf32> to vector<512x32xf32>
    %8 = arith.mulf %6, %7 : vector<512x32xf32>
    %9 = arith.addf %3, %8 : vector<512x32xf32>
    %10 = vector.extract_strided_slice %0 {offsets = [0, 1], sizes = [512, 1], strides = [1, 1]} : vector<512x4xf32> to vector<512x1xf32>
    %c1 = arith.constant 1 : index
    %c0_5 = arith.constant 0 : index
    %11 = vector.load %arg4[%c1, %c0_5] : memref<4x32xf32, #tpu.memory_space<vmem>>, vector<1x32xf32>
    %12 = vector.broadcast %10 : vector<512x1xf32> to vector<512x32xf32>
    %13 = vector.broadcast %11 : vector<1x32xf32> to vector<512x32xf32>
    %14 = arith.mulf %12, %13 : vector<512x32xf32>
    %15 = arith.addf %9, %14 : vector<512x32xf32>
    %16 = vector.extract_strided_slice %0 {offsets = [0, 2], sizes = [512, 1], strides = [1, 1]} : vector<512x4xf32> to vector<512x1xf32>
    %c2 = arith.constant 2 : index
    %c0_6 = arith.constant 0 : index
    %17 = vector.load %arg4[%c2, %c0_6] : memref<4x32xf32, #tpu.memory_space<vmem>>, vector<1x32xf32>
    %18 = vector.broadcast %16 : vector<512x1xf32> to vector<512x32xf32>
    %19 = vector.broadcast %17 : vector<1x32xf32> to vector<512x32xf32>
    %20 = arith.mulf %18, %19 : vector<512x32xf32>
    %21 = arith.addf %15, %20 : vector<512x32xf32>
    %22 = vector.extract_strided_slice %0 {offsets = [0, 3], sizes = [512, 1], strides = [1, 1]} : vector<512x4xf32> to vector<512x1xf32>
    %c3 = arith.constant 3 : index
    %c0_7 = arith.constant 0 : index
    %23 = vector.load %arg4[%c3, %c0_7] : memref<4x32xf32, #tpu.memory_space<vmem>>, vector<1x32xf32>
    %24 = vector.broadcast %22 : vector<512x1xf32> to vector<512x32xf32>
    %25 = vector.broadcast %23 : vector<1x32xf32> to vector<512x32xf32>
    %26 = arith.mulf %24, %25 : vector<512x32xf32>
    %27 = arith.addf %21, %26 : vector<512x32xf32>
    %cst = arith.constant 0.000000e+00 : f32
    %28 = vector.broadcast %cst : f32 to vector<512x32xf32>
    %29 = arith.maximumf %27, %28 : vector<512x32xf32>
    %c0_8 = arith.constant 0 : index
    %c0_9 = arith.constant 0 : index
    %30 = vector.load %arg2[%c0_8, %c0_9] : memref<512x32xf32, #tpu.memory_space<vmem>>, vector<512x32xf32>
    %c0_10 = arith.constant 0 : index
    %c0_11 = arith.constant 0 : index
    %31 = vector.load %arg3[%c0_10, %c0_11] : memref<512x32xf32, #tpu.memory_space<vmem>>, vector<512x32xf32>
    %32 = tpu.concatenate %29, %30, %31 in 1 : vector<512x32xf32>, vector<512x32xf32>, vector<512x32xf32> -> vector<512x96xf32>
    %c0_12 = arith.constant 0 : index
    %c0_13 = arith.constant 0 : index
    %33 = vector.load %arg6[%c0_12, %c0_13] : memref<96x64xf32, #tpu.memory_space<vmem>>, vector<96x64xf32>
    %cst_14 = arith.constant dense<0.000000e+00> : vector<512x64xf32>
    %34 = tpu.matmul %32, %33, %cst_14 {dimension_numbers = #tpu.dot_dimension_numbers<[1], [0], [0], [1], [0, 0, 1, 1], [], []>} : vector<512x96xf32>, vector<96x64xf32>, vector<512x64xf32> -> vector<512x64xf32>
    %c0_15 = arith.constant 0 : index
    %c0_16 = arith.constant 0 : index
    %35 = vector.load %arg7[%c0_15, %c0_16] : memref<1x64xf32, #tpu.memory_space<vmem>>, vector<1x64xf32>
    %36 = vector.broadcast %35 : vector<1x64xf32> to vector<512x64xf32>
    %37 = arith.addf %34, %36 : vector<512x64xf32>
    %cst_17 = arith.constant 0.000000e+00 : f32
    %38 = vector.broadcast %cst_17 : f32 to vector<512x64xf32>
    %39 = arith.maximumf %37, %38 : vector<512x64xf32>
    %c0_18 = arith.constant 0 : index
    %c0_19 = arith.constant 0 : index
    %40 = vector.load %arg8[%c0_18, %c0_19] : memref<512x64xf32, #tpu.memory_space<vmem>>, vector<512x64xf32>
    tpu.vector_store %arg8[%c0_18, %c0_19], %39 {strides = array<i32>} : memref<512x64xf32, #tpu.memory_space<vmem>>, vector<512x64xf32>,
    return
  }
  func.func @transform_0(%arg0: i32) -> (i32, i32) {
    %c0_i32 = arith.constant 0 : i32
    %c0_i32_0 = arith.constant 0 : i32
    return %arg0, %c0_i32 : i32, i32
  }
  func.func @transform_1(%arg0: i32) -> (i32, i32) {
    %c0_i32 = arith.constant 0 : i32
    %c0_i32_0 = arith.constant 0 : i32
    return %arg0, %c0_i32 : i32, i32
  }
  func.func @transform_2(%arg0: i32) -> (i32, i32) {
    %c0_i32 = arith.constant 0 : i32
    %c0_i32_0 = arith.constant 0 : i32
    return %arg0, %c0_i32 : i32, i32
  }
  func.func @transform_3(%arg0: i32) -> (i32, i32) {
    %c0_i32 = arith.constant 0 : i32
    %c0_i32_0 = arith.constant 0 : i32
    %c0_i32_1 = arith.constant 0 : i32
    return %c0_i32, %c0_i32_0 : i32, i32
  }
  func.func @transform_4(%arg0: i32) -> (i32, i32) {
    %c0_i32 = arith.constant 0 : i32
    %c0_i32_0 = arith.constant 0 : i32
    %c0_i32_1 = arith.constant 0 : i32
    return %c0_i32, %c0_i32_0 : i32, i32
  }
  func.func @transform_5(%arg0: i32) -> (i32, i32) {
    %c0_i32 = arith.constant 0 : i32
    %c0_i32_0 = arith.constant 0 : i32
    %c0_i32_1 = arith.constant 0 : i32
    return %c0_i32, %c0_i32_0 : i32, i32
  }
  func.func @transform_6(%arg0: i32) -> (i32, i32) {
    %c0_i32 = arith.constant 0 : i32
    %c0_i32_0 = arith.constant 0 : i32
    %c0_i32_1 = arith.constant 0 : i32
    return %c0_i32, %c0_i32_0 : i32, i32
  }
  func.func @transform_7(%arg0: i32) -> (i32, i32) {
    %c0_i32 = arith.constant 0 : i32
    %c0_i32_0 = arith.constant 0 : i32
    return %arg0, %c0_i32 : i32, i32
  }
}

</mosaic_0001>

<llo_original>
// kernel: tpu_custom_call.1
$region0: #{tpu_custom_call.1}
  #allocation0 [shape = 'u32[]', space=smem, size = 0x4, offset = 0x4, fixed_abs, tag = 'smem constant byte address 0x4 - core index']
  #allocation1 [shape = 'u32[144,128]{1,0:T(1,128)}', space=vmem, size = 0x12000, scoped, tag = 'internal scratch']
  %s0 = inlined_call_operand.vmem [shape: f32[512,4], index: 0, kind: input, shape index: {}]
  %s1 = inlined_call_operand.vmem [shape: f32[512,32], index: 1, kind: input, shape index: {}]
  %s2 = inlined_call_operand.vmem [shape: f32[512,32], index: 2, kind: input, shape index: {}]
  %s3 = inlined_call_operand.vmem [shape: f32[4,32], index: 3, kind: input, shape index: {}]
  %s4 = inlined_call_operand.vmem [shape: f32[1,32], index: 4, kind: input, shape index: {}]
  %s5 = inlined_call_operand.vmem [shape: f32[96,64], index: 5, kind: input, shape index: {}]
  %s6 = inlined_call_operand.vmem [shape: f32[1,64], index: 6, kind: input, shape index: {}]
  %s7 = inlined_call_operand.vmem [shape: f32[512,64], index: 7, kind: output, shape index: {}]
  %s8 = sld [smem:[#allocation0]]
  $region38: #{tpu_custom_call.1} parent=0
    _
  %s10 = ssub.s32 1, %s8
  %s11 = scalar_select 0, %s10, %s8
  // Predicated region
  $region2: #{tpu_custom_call.1} parent=0 // pred_check
    _
  $region3: #{tpu_custom_call.1} parent=0 // pred_check_branch
    %13 = sbr.rel (0) target = $region5
  $region4: #{tpu_custom_call.1} parent=0 // pred_region
    _
  $region5: #{tpu_custom_call.1} parent=0 // pred_fallthru
    _
  // Predicated region
  $region6: #{tpu_custom_call.1} parent=0 // pred_check
    _
  $region7: #{tpu_custom_call.1} parent=0 // pred_check_branch
    %15 = sbr.rel (0) target = $region9
  $region8: #{tpu_custom_call.1} parent=0 // pred_region
    _
  $region9: #{tpu_custom_call.1} parent=0 // pred_fallthru
    _
  // Predicated region
  $region10: #{tpu_custom_call.1} parent=0 // pred_check
    _
  $region11: #{tpu_custom_call.1} parent=0 // pred_check_branch
    %17 = sbr.rel (0) target = $region13
  $region12: #{tpu_custom_call.1} parent=0 // pred_region
    _
  $region13: #{tpu_custom_call.1} parent=0 // pred_fallthru
    _
  // Predicated region
  $region14: #{tpu_custom_call.1} parent=0 // pred_check
    _
  $region15: #{tpu_custom_call.1} parent=0 // pred_check_branch
    %19 = sbr.rel (0) target = $region17
  $region16: #{tpu_custom_call.1} parent=0 // pred_region
    _
  $region17: #{tpu_custom_call.1} parent=0 // pred_fallthru
    _
  // Predicated region
  $region18: #{tpu_custom_call.1} parent=0 // pred_check
    _
  $region19: #{tpu_custom_call.1} parent=0 // pred_check_branch
    %21 = sbr.rel (0) target = $region21
  $region20: #{tpu_custom_call.1} parent=0 // pred_region
    _
  $region21: #{tpu_custom_call.1} parent=0 // pred_fallthru
    _
  // Predicated region
  $region22: #{tpu_custom_call.1} parent=0 // pred_check
    _
  $region23: #{tpu_custom_call.1} parent=0 // pred_check_branch
    %23 = sbr.rel (0) target = $region25
  $region24: #{tpu_custom_call.1} parent=0 // pred_region
    _
  $region25: #{tpu_custom_call.1} parent=0 // pred_fallthru
    _
  // Predicated region
  $region26: #{tpu_custom_call.1} parent=0 // pred_check
    _
  $region27: #{tpu_custom_call.1} parent=0 // pred_check_branch
    %25 = sbr.rel (0) target = $region29
  $region28: #{tpu_custom_call.1} parent=0 // pred_region
    _
  $region29: #{tpu_custom_call.1} parent=0 // pred_fallthru
    _
  %v26 = vld [vmem:[%s0] sm:$0xff]
  %v27 = vld [vmem:[%s0 + $0x8] sm:$0xff]
  %v28 = vld [vmem:[%s0 + $0x10] sm:$0xff]
  %v29 = vld [vmem:[%s0 + $0x18] sm:$0xff]
  %v30 = vld [vmem:[%s0 + $0x20] sm:$0xff]
  %v31 = vld [vmem:[%s0 + $0x28] sm:$0xff]
  %v32 = vld [vmem:[%s0 + $0x30] sm:$0xff]
  %v33 = vld [vmem:[%s0 + $0x38] sm:$0xff]
  %v34 = vld [vmem:[%s0 + $0x40] sm:$0xff]
  %v35 = vld [vmem:[%s0 + $0x48] sm:$0xff]
  %v36 = vld [vmem:[%s0 + $0x50] sm:$0xff]
  %v37 = vld [vmem:[%s0 + $0x58] sm:$0xff]
  %v38 = vld [vmem:[%s0 + $0x60] sm:$0xff]
  %v39 = vld [vmem:[%s0 + $0x68] sm:$0xff]
  %v40 = vld [vmem:[%s0 + $0x70] sm:$0xff]
  %v41 = vld [vmem:[%s0 + $0x78] sm:$0xff]
  %v42 = vld [vmem:[%s0 + $0x80] sm:$0xff]
  %v43 = vld [vmem:[%s0 + $0x88] sm:$0xff]
  %v44 = vld [vmem:[%s0 + $0x90] sm:$0xff]
  %v45 = vld [vmem:[%s0 + $0x98] sm:$0xff]
  %v46 = vld [vmem:[%s0 + $0xa0] sm:$0xff]
  %v47 = vld [vmem:[%s0 + $0xa8] sm:$0xff]
  %v48 = vld [vmem:[%s0 + $0xb0] sm:$0xff]
  %v49 = vld [vmem:[%s0 + $0xb8] sm:$0xff]
  %v50 = vld [vmem:[%s0 + $0xc0] sm:$0xff]
  %v51 = vld [vmem:[%s0 + $0xc8] sm:$0xff]
  %v52 = vld [vmem:[%s0 + $0xd0] sm:$0xff]
  %v53 = vld [vmem:[%s0 + $0xd8] sm:$0xff]
  %v54 = vld [vmem:[%s0 + $0xe0] sm:$0xff]
  %v55 = vld [vmem:[%s0 + $0xe8] sm:$0xff]
  %v56 = vld [vmem:[%s0 + $0xf0] sm:$0xff]
  %v57 = vld [vmem:[%s0 + $0xf8] sm:$0xff]
  %v58 = vld [vmem:[%s0 + $0x100] sm:$0xff]
  %v59 = vld [vmem:[%s0 + $0x108] sm:$0xff]
  %v60 = vld [vmem:[%s0 + $0x110] sm:$0xff]
  %v61 = vld [vmem:[%s0 + $0x118] sm:$0xff]
  %v62 = vld [vmem:[%s0 + $0x120] sm:$0xff]
  %v63 = vld [vmem:[%s0 + $0x128] sm:$0xff]
  %v64 = vld [vmem:[%s0 + $0x130] sm:$0xff]
  %v65 = vld [vmem:[%s0 + $0x138] sm:$0xff]
  %v66 = vld [vmem:[%s0 + $0x140] sm:$0xff]
  %v67 = vld [vmem:[%s0 + $0x148] sm:$0xff]
  %v68 = vld [vmem:[%s0 + $0x150] sm:$0xff]
  %v69 = vld [vmem:[%s0 + $0x158] sm:$0xff]
  %v70 = vld [vmem:[%s0 + $0x160] sm:$0xff]
  %v71 = vld [vmem:[%s0 + $0x168] sm:$0xff]
  %v72 = vld [vmem:[%s0 + $0x170] sm:$0xff]
  %v73 = vld [vmem:[%s0 + $0x178] sm:$0xff]
  %v74 = vld [vmem:[%s0 + $0x180] sm:$0xff]
  %v75 = vld [vmem:[%s0 + $0x188] sm:$0xff]
  %v76 = vld [vmem:[%s0 + $0x190] sm:$0xff]
  %v77 = vld [vmem:[%s0 + $0x198] sm:$0xff]
  %v78 = vld [vmem:[%s0 + $0x1a0] sm:$0xff]
  %v79 = vld [vmem:[%s0 + $0x1a8] sm:$0xff]
  %v80 = vld [vmem:[%s0 + $0x1b0] sm:$0xff]
  %v81 = vld [vmem:[%s0 + $0x1b8] sm:$0xff]
  %v82 = vld [vmem:[%s0 + $0x1c0] sm:$0xff]
  %v83 = vld [vmem:[%s0 + $0x1c8] sm:$0xff]
  %v84 = vld [vmem:[%s0 + $0x1d0] sm:$0xff]
  %v85 = vld [vmem:[%s0 + $0x1d8] sm:$0xff]
  %v86 = vld [vmem:[%s0 + $0x1e0] sm:$0xff]
  %v87 = vld [vmem:[%s0 + $0x1e8] sm:$0xff]
  %v88 = vld [vmem:[%s0 + $0x1f0] sm:$0xff]
  %v89 = vld [vmem:[%s0 + $0x1f8] sm:$0xff]
  %v90 = vld [vmem:[%s4] sm:$0x1]
  %v92 = vlaneseq
  %v93 = vshrl.u32 %v92, 7
  %v94 = vsub.s32 0, %v93
  %v95 = vrot.slane %v90, %v94
  %v97 = vld [vmem:[%s3] sm:$0x1]
  %99 = vset.pattern.permute.xlu0 0
  %100 = vperm.xlu0 %99, %v26
  %v101 = vpop.permute.xlu0 %100
  %104 = vset.pattern.permute.xlu0 0
  %105 = vperm.xlu0 %104, %v27
  %v106 = vpop.permute.xlu0 %105
  %109 = vset.pattern.permute.xlu0 0
  %110 = vperm.xlu0 %109, %v28
  %v111 = vpop.permute.xlu0 %110
  %114 = vset.pattern.permute.xlu0 0
  %115 = vperm.xlu0 %114, %v29
  %v116 = vpop.permute.xlu0 %115
  %119 = vset.pattern.permute.xlu0 0
  %120 = vperm.xlu0 %119, %v30
  %v121 = vpop.permute.xlu0 %120
  %124 = vset.pattern.permute.xlu0 0
  %125 = vperm.xlu0 %124, %v31
  %v126 = vpop.permute.xlu0 %125
  %129 = vset.pattern.permute.xlu0 0
  %130 = vperm.xlu0 %129, %v32
  %v131 = vpop.permute.xlu0 %130
  %134 = vset.pattern.permute.xlu0 0
  %135 = vperm.xlu0 %134, %v33
  %v136 = vpop.permute.xlu0 %135
  %139 = vset.pattern.permute.xlu0 0
  %140 = vperm.xlu0 %139, %v34
  %v141 = vpop.permute.xlu0 %140
  %144 = vset.pattern.permute.xlu0 0
  %145 = vperm.xlu0 %144, %v35
  %v146 = vpop.permute.xlu0 %145
  %149 = vset.pattern.permute.xlu0 0
  %150 = vperm.xlu0 %149, %v36
  %v151 = vpop.permute.xlu0 %150
  %154 = vset.pattern.permute.xlu0 0
  %155 = vperm.xlu0 %154, %v37
  %v156 = vpop.permute.xlu0 %155
  %159 = vset.pattern.permute.xlu0 0
  %160 = vperm.xlu0 %159, %v38
  %v161 = vpop.permute.xlu0 %160
  %164 = vset.pattern.permute.xlu0 0
  %165 = vperm.xlu0 %164, %v39
  %v166 = vpop.permute.xlu0 %165
  %169 = vset.pattern.permute.xlu0 0
  %170 = vperm.xlu0 %169, %v40
  %v171 = vpop.permute.xlu0 %170
  %174 = vset.pattern.permute.xlu0 0
  %175 = vperm.xlu0 %174, %v41
  %v176 = vpop.permute.xlu0 %175
  %179 = vset.pattern.permute.xlu0 0
  %180 = vperm.xlu0 %179, %v42
  %v181 = vpop.permute.xlu0 %180
  %184 = vset.pattern.permute.xlu0 0
  %185 = vperm.xlu0 %184, %v43
  %v186 = vpop.permute.xlu0 %185
  %189 = vset.pattern.permute.xlu0 0
  %190 = vperm.xlu0 %189, %v44
  %v191 = vpop.permute.xlu0 %190
  %194 = vset.pattern.permute.xlu0 0
  %195 = vperm.xlu0 %194, %v45
  %v196 = vpop.permute.xlu0 %195
  %199 = vset.pattern.permute.xlu0 0
  %200 = vperm.xlu0 %199, %v46
  %v201 = vpop.permute.xlu0 %200
  %204 = vset.pattern.permute.xlu0 0
  %205 = vperm.xlu0 %204, %v47
  %v206 = vpop.permute.xlu0 %205
  %209 = vset.pattern.permute.xlu0 0
  %210 = vperm.xlu0 %209, %v48
  %v211 = vpop.permute.xlu0 %210
  %214 = vset.pattern.permute.xlu0 0
  %215 = vperm.xlu0 %214, %v49
  %v216 = vpop.permute.xlu0 %215
  %219 = vset.pattern.permute.xlu0 0
  %220 = vperm.xlu0 %219, %v50
  %v221 = vpop.permute.xlu0 %220
  %224 = vset.pattern.permute.xlu0 0
  %225 = vperm.xlu0 %224, %v51
  %v226 = vpop.permute.xlu0 %225
  %229 = vset.pattern.permute.xlu0 0
  %230 = vperm.xlu0 %229, %v52
  %v231 = vpop.permute.xlu0 %230
  %234 = vset.pattern.permute.xlu0 0
  %235 = vperm.xlu0 %234, %v53
  %v236 = vpop.permute.xlu0 %235
  %239 = vset.pattern.permute.xlu0 0
  %240 = vperm.xlu0 %239, %v54
  %v241 = vpop.permute.xlu0 %240
  %244 = vset.pattern.permute.xlu0 0
  %245 = vperm.xlu0 %244, %v55
  %v246 = vpop.permute.xlu0 %245
  %249 = vset.pattern.permute.xlu0 0
  %250 = vperm.xlu0 %249, %v56
  %v251 = vpop.permute.xlu0 %250
  %254 = vset.pattern.permute.xlu0 0
  %255 = vperm.xlu0 %254, %v57
  %v256 = vpop.permute.xlu0 %255
  %259 = vset.pattern.permute.xlu0 0
  %260 = vperm.xlu0 %259, %v58
  %v261 = vpop.permute.xlu0 %260
  %264 = vset.pattern.permute.xlu0 0
  %265 = vperm.xlu0 %264, %v59
  %v266 = vpop.permute.xlu0 %265
  %269 = vset.pattern.permute.xlu0 0
  %270 = vperm.xlu0 %269, %v60
  %v271 = vpop.permute.xlu0 %270
  %274 = vset.pattern.permute.xlu0 0
  %275 = vperm.xlu0 %274, %v61
  %v276 = vpop.permute.xlu0 %275
  %279 = vset.pattern.permute.xlu0 0
  %280 = vperm.xlu0 %279, %v62
  %v281 = vpop.permute.xlu0 %280
  %284 = vset.pattern.permute.xlu0 0
  %285 = vperm.xlu0 %284, %v63
  %v286 = vpop.permute.xlu0 %285
  %289 = vset.pattern.permute.xlu0 0
  %290 = vperm.xlu0 %289, %v64
  %v291 = vpop.permute.xlu0 %290
  %294 = vset.pattern.permute.xlu0 0
  %295 = vperm.xlu0 %294, %v65
  %v296 = vpop.permute.xlu0 %295
  %299 = vset.pattern.permute.xlu0 0
  %300 = vperm.xlu0 %299, %v66
  %v301 = vpop.permute.xlu0 %300
  %304 = vset.pattern.permute.xlu0 0
  %305 = vperm.xlu0 %304, %v67
  %v306 = vpop.permute.xlu0 %305
  %309 = vset.pattern.permute.xlu0 0
  %310 = vperm.xlu0 %309, %v68
  %v311 = vpop.permute.xlu0 %310
  %314 = vset.pattern.permute.xlu0 0
  %315 = vperm.xlu0 %314, %v69
  %v316 = vpop.permute.xlu0 %315
  %319 = vset.pattern.permute.xlu0 0
  %320 = vperm.xlu0 %319, %v70
  %v321 = vpop.permute.xlu0 %320
  %324 = vset.pattern.permute.xlu0 0
  %325 = vperm.xlu0 %324, %v71
  %v326 = vpop.permute.xlu0 %325
  %329 = vset.pattern.permute.xlu0 0
  %330 = vperm.xlu0 %329, %v72
  %v331 = vpop.permute.xlu0 %330
  %334 = vset.pattern.permute.xlu0 0
  %335 = vperm.xlu0 %334, %v73
  %v336 = vpop.permute.xlu0 %335
  %339 = vset.pattern.permute.xlu0 0
  %340 = vperm.xlu0 %339, %v74
  %v341 = vpop.permute.xlu0 %340
  %344 = vset.pattern.permute.xlu0 0
  %345 = vperm.xlu0 %344, %v75
  %v346 = vpop.permute.xlu0 %345
  %349 = vset.pattern.permute.xlu0 0
  %350 = vperm.xlu0 %349, %v76
  %v351 = vpop.permute.xlu0 %350
  %354 = vset.pattern.permute.xlu0 0
  %355 = vperm.xlu0 %354, %v77
  %v356 = vpop.permute.xlu0 %355
  %359 = vset.pattern.permute.xlu0 0
  %360 = vperm.xlu0 %359, %v78
  %v361 = vpop.permute.xlu0 %360
  %364 = vset.pattern.permute.xlu0 0
  %365 = vperm.xlu0 %364, %v79
  %v366 = vpop.permute.xlu0 %365
  %369 = vset.pattern.permute.xlu0 0
  %370 = vperm.xlu0 %369, %v80
  %v371 = vpop.permute.xlu0 %370
  %374 = vset.pattern.permute.xlu0 0
  %375 = vperm.xlu0 %374, %v81
  %v376 = vpop.permute.xlu0 %375
  %379 = vset.pattern.permute.xlu0 0
  %380 = vperm.xlu0 %379, %v82
  %v381 = vpop.permute.xlu0 %380
  %384 = vset.pattern.permute.xlu0 0
  %385 = vperm.xlu0 %384, %v83
  %v386 = vpop.permute.xlu0 %385
  %389 = vset.pattern.permute.xlu0 0
  %390 = vperm.xlu0 %389, %v84
  %v391 = vpop.permute.xlu0 %390
  %394 = vset.pattern.permute.xlu0 0
  %395 = vperm.xlu0 %394, %v85
  %v396 = vpop.permute.xlu0 %395
  %399 = vset.pattern.permute.xlu0 0
  %400 = vperm.xlu0 %399, %v86
  %v401 = vpop.permute.xlu0 %400
  %404 = vset.pattern.permute.xlu0 0
  %405 = vperm.xlu0 %404, %v87
  %v406 = vpop.permute.xlu0 %405
  %409 = vset.pattern.permute.xlu0 0
  %410 = vperm.xlu0 %409, %v88
  %v411 = vpop.permute.xlu0 %410
  %414 = vset.pattern.permute.xlu0 0
  %415 = vperm.xlu0 %414, %v89
  %v416 = vpop.permute.xlu0 %415
  %v418 = vlaneseq
  %v419 = vshrl.u32 %v418, 7
  %v420 = vsub.s32 0, %v419
  %v421 = vrot.slane %v97, %v420
  %v422 = vmul.f32 %v101, %v421
  %v423 = vmul.f32 %v106, %v421
  %v424 = vmul.f32 %v111, %v421
  %v425 = vmul.f32 %v116, %v421
  %v426 = vmul.f32 %v121, %v421
  %v427 = vmul.f32 %v126, %v421
  %v428 = vmul.f32 %v131, %v421
  %v429 = vmul.f32 %v136, %v421
  %v430 = vmul.f32 %v141, %v421
  %v431 = vmul.f32 %v146, %v421
  %v432 = vmul.f32 %v151, %v421
  %v433 = vmul.f32 %v156, %v421
  %v434 = vmul.f32 %v161, %v421
  %v435 = vmul.f32 %v166, %v421
  %v436 = vmul.f32 %v171, %v421
  %v437 = vmul.f32 %v176, %v421
  %v438 = vmul.f32 %v181, %v421
  %v439 = vmul.f32 %v186, %v421
  %v440 = vmul.f32 %v191, %v421
  %v441 = vmul.f32 %v196, %v421
  %v442 = vmul.f32 %v201, %v421
  %v443 = vmul.f32 %v206, %v421
  %v444 = vmul.f32 %v211, %v421
  %v445 = vmul.f32 %v216, %v421
  %v446 = vmul.f32 %v221, %v421
  %v447 = vmul.f32 %v226, %v421
  %v448 = vmul.f32 %v231, %v421
  %v449 = vmul.f32 %v236, %v421
  %v450 = vmul.f32 %v241, %v421
  %v451 = vmul.f32 %v246, %v421
  %v452 = vmul.f32 %v251, %v421
  %v453 = vmul.f32 %v256, %v421
  %v454 = vmul.f32 %v261, %v421
  %v455 = vmul.f32 %v266, %v421
  %v456 = vmul.f32 %v271, %v421
  %v457 = vmul.f32 %v276, %v421
  %v458 = vmul.f32 %v281, %v421
  %v459 = vmul.f32 %v286, %v421
  %v460 = vmul.f32 %v291, %v421
  %v461 = vmul.f32 %v296, %v421
  %v462 = vmul.f32 %v301, %v421
  %v463 = vmul.f32 %v306, %v421
  %v464 = vmul.f32 %v311, %v421
  %v465 = vmul.f32 %v316, %v421
  %v466 = vmul.f32 %v321, %v421
  %v467 = vmul.f32 %v326, %v421
  %v468 = vmul.f32 %v331, %v421
  %v469 = vmul.f32 %v336, %v421
  %v470 = vmul.f32 %v341, %v421
  %v471 = vmul.f32 %v346, %v421
  %v472 = vmul.f32 %v351, %v421
  %v473 = vmul.f32 %v356, %v421
  %v474 = vmul.f32 %v361, %v421
  %v475 = vmul.f32 %v366, %v421
  %v476 = vmul.f32 %v371, %v421
  %v477 = vmul.f32 %v376, %v421
  %v478 = vmul.f32 %v381, %v421
  %v479 = vmul.f32 %v386, %v421
  %v480 = vmul.f32 %v391, %v421
  %v481 = vmul.f32 %v396, %v421
  %v482 = vmul.f32 %v401, %v421
  %v483 = vmul.f32 %v406, %v421
  %v484 = vmul.f32 %v411, %v421
  %v485 = vmul.f32 %v416, %v421
  %v486 = vadd.f32 %v95, %v422
  %v487 = vadd.f32 %v95, %v423
  %v488 = vadd.f32 %v95, %v424
  %v489 = vadd.f32 %v95, %v425
  %v490 = vadd.f32 %v95, %v426
  %v491 = vadd.f32 %v95, %v427
  %v492 = vadd.f32 %v95, %v428
  %v493 = vadd.f32 %v95, %v429
  %v494 = vadd.f32 %v95, %v430
  %v495 = vadd.f32 %v95, %v431
  %v496 = vadd.f32 %v95, %v432
  %v497 = vadd.f32 %v95, %v433
  %v498 = vadd.f32 %v95, %v434
  %v499 = vadd.f32 %v95, %v435
  %v500 = vadd.f32 %v95, %v436
  %v501 = vadd.f32 %v95, %v437
  %v502 = vadd.f32 %v95, %v438
  %v503 = vadd.f32 %v95, %v439
  %v504 = vadd.f32 %v95, %v440
  %v505 = vadd.f32 %v95, %v441
  %v506 = vadd.f32 %v95, %v442
  %v507 = vadd.f32 %v95, %v443
  %v508 = vadd.f32 %v95, %v444
  %v509 = vadd.f32 %v95, %v445
  %v510 = vadd.f32 %v95, %v446
  %v511 = vadd.f32 %v95, %v447
  %v512 = vadd.f32 %v95, %v448
  %v513 = vadd.f32 %v95, %v449
  %v514 = vadd.f32 %v95, %v450
  %v515 = vadd.f32 %v95, %v451
  %v516 = vadd.f32 %v95, %v452
  %v517 = vadd.f32 %v95, %v453
  %v518 = vadd.f32 %v95, %v454
  %v519 = vadd.f32 %v95, %v455
  %v520 = vadd.f32 %v95, %v456
  %v521 = vadd.f32 %v95, %v457
  %v522 = vadd.f32 %v95, %v458
  %v523 = vadd.f32 %v95, %v459
  %v524 = vadd.f32 %v95, %v460
  %v525 = vadd.f32 %v95, %v461
  %v526 = vadd.f32 %v95, %v462
  %v527 = vadd.f32 %v95, %v463
  %v528 = vadd.f32 %v95, %v464
  %v529 = vadd.f32 %v95, %v465
  %v530 = vadd.f32 %v95, %v466
  %v531 = vadd.f32 %v95, %v467
  %v532 = vadd.f32 %v95, %v468
  %v533 = vadd.f32 %v95, %v469
  %v534 = vadd.f32 %v95, %v470
  %v535 = vadd.f32 %v95, %v471
  %v536 = vadd.f32 %v95, %v472
  %v537 = vadd.f32 %v95, %v473
  %v538 = vadd.f32 %v95, %v474
  %v539 = vadd.f32 %v95, %v475
  %v540 = vadd.f32 %v95, %v476
  %v541 = vadd.f32 %v95, %v477
  %v542 = vadd.f32 %v95, %v478
  %v543 = vadd.f32 %v95, %v479
  %v544 = vadd.f32 %v95, %v480
  %v545 = vadd.f32 %v95, %v481
  %v546 = vadd.f32 %v95, %v482
  %v547 = vadd.f32 %v95, %v483
  %v548 = vadd.f32 %v95, %v484
  %v549 = vadd.f32 %v95, %v485
  %v550 = vld [vmem:[%s3 + $0x1] sm:$0x1]
  %551 = vset.pattern.permute.xlu0 1
  %552 = vperm.xlu0 %551, %v26
  %v553 = vpop.permute.xlu0 %552
  %555 = vset.pattern.permute.xlu0 1
  %556 = vperm.xlu0 %555, %v27
  %v557 = vpop.permute.xlu0 %556
  %559 = vset.pattern.permute.xlu0 1
  %560 = vperm.xlu0 %559, %v28
  %v561 = vpop.permute.xlu0 %560
  %563 = vset.pattern.permute.xlu0 1
  %564 = vperm.xlu0 %563, %v29
  %v565 = vpop.permute.xlu0 %564
  %567 = vset.pattern.permute.xlu0 1
  %568 = vperm.xlu0 %567, %v30
  %v569 = vpop.permute.xlu0 %568
  %571 = vset.pattern.permute.xlu0 1
  %572 = vperm.xlu0 %571, %v31
  %v573 = vpop.permute.xlu0 %572
  %575 = vset.pattern.permute.xlu0 1
  %576 = vperm.xlu0 %575, %v32
  %v577 = vpop.permute.xlu0 %576
  %579 = vset.pattern.permute.xlu0 1
  %580 = vperm.xlu0 %579, %v33
  %v581 = vpop.permute.xlu0 %580
  %583 = vset.pattern.permute.xlu0 1
  %584 = vperm.xlu0 %583, %v34
  %v585 = vpop.permute.xlu0 %584
  %587 = vset.pattern.permute.xlu0 1
  %588 = vperm.xlu0 %587, %v35
  %v589 = vpop.permute.xlu0 %588
  %591 = vset.pattern.permute.xlu0 1
  %592 = vperm.xlu0 %591, %v36
  %v593 = vpop.permute.xlu0 %592
  %595 = vset.pattern.permute.xlu0 1
  %596 = vperm.xlu0 %595, %v37
  %v597 = vpop.permute.xlu0 %596
  %599 = vset.pattern.permute.xlu0 1
  %600 = vperm.xlu0 %599, %v38
  %v601 = vpop.permute.xlu0 %600
  %603 = vset.pattern.permute.xlu0 1
  %604 = vperm.xlu0 %603, %v39
  %v605 = vpop.permute.xlu0 %604
  %607 = vset.pattern.permute.xlu0 1
  %608 = vperm.xlu0 %607, %v40
  %v609 = vpop.permute.xlu0 %608
  %611 = vset.pattern.permute.xlu0 1
  %612 = vperm.xlu0 %611, %v41
  %v613 = vpop.permute.xlu0 %612
  %615 = vset.pattern.permute.xlu0 1
  %616 = vperm.xlu0 %615, %v42
  %v617 = vpop.permute.xlu0 %616
  %619 = vset.pattern.permute.xlu0 1
  %620 = vperm.xlu0 %619, %v43
  %v621 = vpop.permute.xlu0 %620
  %623 = vset.pattern.permute.xlu0 1
  %624 = vperm.xlu0 %623, %v44
  %v625 = vpop.permute.xlu0 %624
  %627 = vset.pattern.permute.xlu0 1
  %628 = vperm.xlu0 %627, %v45
  %v629 = vpop.permute.xlu0 %628
  %631 = vset.pattern.permute.xlu0 1
  %632 = vperm.xlu0 %631, %v46
  %v633 = vpop.permute.xlu0 %632
  %635 = vset.pattern.permute.xlu0 1
  %636 = vperm.xlu0 %635, %v47
  %v637 = vpop.permute.xlu0 %636
  %639 = vset.pattern.permute.xlu0 1
  %640 = vperm.xlu0 %639, %v48
  %v641 = vpop.permute.xlu0 %640
  %643 = vset.pattern.permute.xlu0 1
  %644 = vperm.xlu0 %643, %v49
  %v645 = vpop.permute.xlu0 %644
  %647 = vset.pattern.permute.xlu0 1
  %648 = vperm.xlu0 %647, %v50
  %v649 = vpop.permute.xlu0 %648
  %651 = vset.pattern.permute.xlu0 1
  %652 = vperm.xlu0 %651, %v51
  %v653 = vpop.permute.xlu0 %652
  %655 = vset.pattern.permute.xlu0 1
  %656 = vperm.xlu0 %655, %v52
  %v657 = vpop.permute.xlu0 %656
  %659 = vset.pattern.permute.xlu0 1
  %660 = vperm.xlu0 %659, %v53
  %v661 = vpop.permute.xlu0 %660
  %663 = vset.pattern.permute.xlu0 1
  %664 = vperm.xlu0 %663, %v54
  %v665 = vpop.permute.xlu0 %664
  %667 = vset.pattern.permute.xlu0 1
  %668 = vperm.xlu0 %667, %v55
  %v669 = vpop.permute.xlu0 %668
  %671 = vset.pattern.permute.xlu0 1
  %672 = vperm.xlu0 %671, %v56
  %v673 = vpop.permute.xlu0 %672
  %675 = vset.pattern.permute.xlu0 1
  %676 = vperm.xlu0 %675, %v57
  %v677 = vpop.permute.xlu0 %676
  %679 = vset.pattern.permute.xlu0 1
  %680 = vperm.xlu0 %679, %v58
  %v681 = vpop.permute.xlu0 %680
  %683 = vset.pattern.permute.xlu0 1
  %684 = vperm.xlu0 %683, %v59
  %v685 = vpop.permute.xlu0 %684
  %687 = vset.pattern.permute.xlu0 1
  %688 = vperm.xlu0 %687, %v60
  %v689 = vpop.permute.xlu0 %688
  %691 = vset.pattern.permute.xlu0 1
  %692 = vperm.xlu0 %691, %v61
  %v693 = vpop.permute.xlu0 %692
  %695 = vset.pattern.permute.xlu0 1
  %696 = vperm.xlu0 %695, %v62
  %v697 = vpop.permute.xlu0 %696
  %699 = vset.pattern.permute.xlu0 1
  %700 = vperm.xlu0 %699, %v63
  %v701 = vpop.permute.xlu0 %700
  %703 = vset.pattern.permute.xlu0 1
  %704 = vperm.xlu0 %703, %v64
  %v705 = vpop.permute.xlu0 %704
  %707 = vset.pattern.permute.xlu0 1
  %708 = vperm.xlu0 %707, %v65
  %v709 = vpop.permute.xlu0 %708
  %711 = vset.pattern.permute.xlu0 1
  %712 = vperm.xlu0 %711, %v66
  %v713 = vpop.permute.xlu0 %712
  %715 = vset.pattern.permute.xlu0 1
  %716 = vperm.xlu0 %715, %v67
  %v717 = vpop.permute.xlu0 %716
  %719 = vset.pattern.permute.xlu0 1
  %720 = vperm.xlu0 %719, %v68
  %v721 = vpop.permute.xlu0 %720
  %723 = vset.pattern.permute.xlu0 1
  %724 = vperm.xlu0 %723, %v69
  %v725 = vpop.permute.xlu0 %724
  %727 = vset.pattern.permute.xlu0 1
  %728 = vperm.xlu0 %727, %v70
  %v729 = vpop.permute.xlu0 %728
  %731 = vset.pattern.permute.xlu0 1
  %732 = vperm.xlu0 %731, %v71
  %v733 = vpop.permute.xlu0 %732
  %735 = vset.pattern.permute.xlu0 1
  %736 = vperm.xlu0 %735, %v72
  %v737 = vpop.permute.xlu0 %736
  %739 = vset.pattern.permute.xlu0 1
  %740 = vperm.xlu0 %739, %v73
  %v741 = vpop.permute.xlu0 %740
  %743 = vset.pattern.permute.xlu0 1
  %744 = vperm.xlu0 %743, %v74
  %v745 = vpop.permute.xlu0 %744
  %747 = vset.pattern.permute.xlu0 1
  %748 = vperm.xlu0 %747, %v75
  %v749 = vpop.permute.xlu0 %748
  %751 = vset.pattern.permute.xlu0 1
  %752 = vperm.xlu0 %751, %v76
  %v753 = vpop.permute.xlu0 %752
  %755 = vset.pattern.permute.xlu0 1
  %756 = vperm.xlu0 %755, %v77
  %v757 = vpop.permute.xlu0 %756
  %759 = vset.pattern.permute.xlu0 1
  %760 = vperm.xlu0 %759, %v78
  %v761 = vpop.permute.xlu0 %760
  %763 = vset.pattern.permute.xlu0 1
  %764 = vperm.xlu0 %763, %v79
  %v765 = vpop.permute.xlu0 %764
  %767 = vset.pattern.permute.xlu0 1
  %768 = vperm.xlu0 %767, %v80
  %v769 = vpop.permute.xlu0 %768
  %771 = vset.pattern.permute.xlu0 1
  %772 = vperm.xlu0 %771, %v81
  %v773 = vpop.permute.xlu0 %772
  %775 = vset.pattern.permute.xlu0 1
  %776 = vperm.xlu0 %775, %v82
  %v777 = vpop.permute.xlu0 %776
  %779 = vset.pattern.permute.xlu0 1
  %780 = vperm.xlu0 %779, %v83
  %v781 = vpop.permute.xlu0 %780
  %783 = vset.pattern.permute.xlu0 1
  %784 = vperm.xlu0 %783, %v84
  %v785 = vpop.permute.xlu0 %784
  %787 = vset.pattern.permute.xlu0 1
  %788 = vperm.xlu0 %787, %v85
  %v789 = vpop.permute.xlu0 %788
  %791 = vset.pattern.permute.xlu0 1
  %792 = vperm.xlu0 %791, %v86
  %v793 = vpop.permute.xlu0 %792
  %795 = vset.pattern.permute.xlu0 1
  %796 = vperm.xlu0 %795, %v87
  %v797 = vpop.permute.xlu0 %796
  %799 = vset.pattern.permute.xlu0 1
  %800 = vperm.xlu0 %799, %v88
  %v801 = vpop.permute.xlu0 %800
  %803 = vset.pattern.permute.xlu0 1
  %804 = vperm.xlu0 %803, %v89
  %v805 = vpop.permute.xlu0 %804
  %v807 = vlaneseq
  %v808 = vshrl.u32 %v807, 7
  %v809 = vsub.s32 0, %v808
  %v810 = vrot.slane %v550, %v809
  %v811 = vmul.f32 %v553, %v810
  %v812 = vmul.f32 %v557, %v810
  %v813 = vmul.f32 %v561, %v810
  %v814 = vmul.f32 %v565, %v810
  %v815 = vmul.f32 %v569, %v810
  %v816 = vmul.f32 %v573, %v810
  %v817 = vmul.f32 %v577, %v810
  %v818 = vmul.f32 %v581, %v810
  %v819 = vmul.f32 %v585, %v810
  %v820 = vmul.f32 %v589, %v810
  %v821 = vmul.f32 %v593, %v810
  %v822 = vmul.f32 %v597, %v810
  %v823 = vmul.f32 %v601, %v810
  %v824 = vmul.f32 %v605, %v810
  %v825 = vmul.f32 %v609, %v810
  %v826 = vmul.f32 %v613, %v810
  %v827 = vmul.f32 %v617, %v810
  %v828 = vmul.f32 %v621, %v810
  %v829 = vmul.f32 %v625, %v810
  %v830 = vmul.f32 %v629, %v810
  %v831 = vmul.f32 %v633, %v810
  %v832 = vmul.f32 %v637, %v810
  %v833 = vmul.f32 %v641, %v810
  %v834 = vmul.f32 %v645, %v810
  %v835 = vmul.f32 %v649, %v810
  %v836 = vmul.f32 %v653, %v810
  %v837 = vmul.f32 %v657, %v810
  %v838 = vmul.f32 %v661, %v810
  %v839 = vmul.f32 %v665, %v810
  %v840 = vmul.f32 %v669, %v810
  %v841 = vmul.f32 %v673, %v810
  %v842 = vmul.f32 %v677, %v810
  %v843 = vmul.f32 %v681, %v810
  %v844 = vmul.f32 %v685, %v810
  %v845 = vmul.f32 %v689, %v810
  %v846 = vmul.f32 %v693, %v810
  %v847 = vmul.f32 %v697, %v810
  %v848 = vmul.f32 %v701, %v810
  %v849 = vmul.f32 %v705, %v810
  %v850 = vmul.f32 %v709, %v810
  %v851 = vmul.f32 %v713, %v810
  %v852 = vmul.f32 %v717, %v810
  %v853 = vmul.f32 %v721, %v810
  %v854 = vmul.f32 %v725, %v810
  %v855 = vmul.f32 %v729, %v810
  %v856 = vmul.f32 %v733, %v810
  %v857 = vmul.f32 %v737, %v810
  %v858 = vmul.f32 %v741, %v810
  %v859 = vmul.f32 %v745, %v810
  %v860 = vmul.f32 %v749, %v810
  %v861 = vmul.f32 %v753, %v810
  %v862 = vmul.f32 %v757, %v810
  %v863 = vmul.f32 %v761, %v810
  %v864 = vmul.f32 %v765, %v810
  %v865 = vmul.f32 %v769, %v810
  %v866 = vmul.f32 %v773, %v810
  %v867 = vmul.f32 %v777, %v810
  %v868 = vmul.f32 %v781, %v810
  %v869 = vmul.f32 %v785, %v810
  %v870 = vmul.f32 %v789, %v810
  %v871 = vmul.f32 %v793, %v810
  %v872 = vmul.f32 %v797, %v810
  %v873 = vmul.f32 %v801, %v810
  %v874 = vmul.f32 %v805, %v810
  %v875 = vadd.f32 %v486, %v811
  %v876 = vadd.f32 %v487, %v812
  %v877 = vadd.f32 %v488, %v813
  %v878 = vadd.f32 %v489, %v814
  %v879 = vadd.f32 %v490, %v815
  %v880 = vadd.f32 %v491, %v816
  %v881 = vadd.f32 %v492, %v817
  %v882 = vadd.f32 %v493, %v818
  %v883 = vadd.f32 %v494, %v819
  %v884 = vadd.f32 %v495, %v820
  %v885 = vadd.f32 %v496, %v821
  %v886 = vadd.f32 %v497, %v822
  %v887 = vadd.f32 %v498, %v823
  %v888 = vadd.f32 %v499, %v824
  %v889 = vadd.f32 %v500, %v825
  %v890 = vadd.f32 %v501, %v826
  %v891 = vadd.f32 %v502, %v827
  %v892 = vadd.f32 %v503, %v828
  %v893 = vadd.f32 %v504, %v829
  %v894 = vadd.f32 %v505, %v830
  %v895 = vadd.f32 %v506, %v831
  %v896 = vadd.f32 %v507, %v832
  %v897 = vadd.f32 %v508, %v833
  %v898 = vadd.f32 %v509, %v834
  %v899 = vadd.f32 %v510, %v835
  %v900 = vadd.f32 %v511, %v836
  %v901 = vadd.f32 %v512, %v837
  %v902 = vadd.f32 %v513, %v838
  %v903 = vadd.f32 %v514, %v839
  %v904 = vadd.f32 %v515, %v840
  %v905 = vadd.f32 %v516, %v841
  %v906 = vadd.f32 %v517, %v842
  %v907 = vadd.f32 %v518, %v843
  %v908 = vadd.f32 %v519, %v844
  %v909 = vadd.f32 %v520, %v845
  %v910 = vadd.f32 %v521, %v846
  %v911 = vadd.f32 %v522, %v847
  %v912 = vadd.f32 %v523, %v848
  %v913 = vadd.f32 %v524, %v849
  %v914 = vadd.f32 %v525, %v850
  %v915 = vadd.f32 %v526, %v851
  %v916 = vadd.f32 %v527, %v852
  %v917 = vadd.f32 %v528, %v853
  %v918 = vadd.f32 %v529, %v854
  %v919 = vadd.f32 %v530, %v855
  %v920 = vadd.f32 %v531, %v856
  %v921 = vadd.f32 %v532, %v857
  %v922 = vadd.f32 %v533, %v858
  %v923 = vadd.f32 %v534, %v859
  %v924 = vadd.f32 %v535, %v860
  %v925 = vadd.f32 %v536, %v861
  %v926 = vadd.f32 %v537, %v862
  %v927 = vadd.f32 %v538, %v863
  %v928 = vadd.f32 %v539, %v864
  %v929 = vadd.f32 %v540, %v865
  %v930 = vadd.f32 %v541, %v866
  %v931 = vadd.f32 %v542, %v867
  %v932 = vadd.f32 %v543, %v868
  %v933 = vadd.f32 %v544, %v869
  %v934 = vadd.f32 %v545, %v870
  %v935 = vadd.f32 %v546, %v871
  %v936 = vadd.f32 %v547, %v872
  %v937 = vadd.f32 %v548, %v873
  %v938 = vadd.f32 %v549, %v874
  %v939 = vld [vmem:[%s3 + $0x2] sm:$0x1]
  %940 = vset.pattern.permute.xlu0 2
  %941 = vperm.xlu0 %940, %v26
  %v942 = vpop.permute.xlu0 %941
  %944 = vset.pattern.permute.xlu0 2
  %945 = vperm.xlu0 %944, %v27
  %v946 = vpop.permute.xlu0 %945
  %948 = vset.pattern.permute.xlu0 2
  %949 = vperm.xlu0 %948, %v28
  %v950 = vpop.permute.xlu0 %949
  %952 = vset.pattern.permute.xlu0 2
  %953 = vperm.xlu0 %952, %v29
  %v954 = vpop.permute.xlu0 %953
  %956 = vset.pattern.permute.xlu0 2
  %957 = vperm.xlu0 %956, %v30
  %v958 = vpop.permute.xlu0 %957
  %960 = vset.pattern.permute.xlu0 2
  %961 = vperm.xlu0 %960, %v31
  %v962 = vpop.permute.xlu0 %961
  %964 = vset.pattern.permute.xlu0 2
  %965 = vperm.xlu0 %964, %v32
  %v966 = vpop.permute.xlu0 %965
  %968 = vset.pattern.permute.xlu0 2
  %969 = vperm.xlu0 %968, %v33
  %v970 = vpop.permute.xlu0 %969
  %972 = vset.pattern.permute.xlu0 2
  %973 = vperm.xlu0 %972, %v34
  %v974 = vpop.permute.xlu0 %973
  %976 = vset.pattern.permute.xlu0 2
  %977 = vperm.xlu0 %976, %v35
  %v978 = vpop.permute.xlu0 %977
  %980 = vset.pattern.permute.xlu0 2
  %981 = vperm.xlu0 %980, %v36
  %v982 = vpop.permute.xlu0 %981
  %984 = vset.pattern.permute.xlu0 2
  %985 = vperm.xlu0 %984, %v37
  %v986 = vpop.permute.xlu0 %985
  %988 = vset.pattern.permute.xlu0 2
  %989 = vperm.xlu0 %988, %v38
  %v990 = vpop.permute.xlu0 %989
  %992 = vset.pattern.permute.xlu0 2
  %993 = vperm.xlu0 %992, %v39
  %v994 = vpop.permute.xlu0 %993
  %996 = vset.pattern.permute.xlu0 2
  %997 = vperm.xlu0 %996, %v40
  %v998 = vpop.permute.xlu0 %997
  %1000 = vset.pattern.permute.xlu0 2
  %1001 = vperm.xlu0 %1000, %v41
  %v1002 = vpop.permute.xlu0 %1001
  %1004 = vset.pattern.permute.xlu0 2
  %1005 = vperm.xlu0 %1004, %v42
  %v1006 = vpop.permute.xlu0 %1005
  %1008 = vset.pattern.permute.xlu0 2
  %1009 = vperm.xlu0 %1008, %v43
  %v1010 = vpop.permute.xlu0 %1009
  %1012 = vset.pattern.permute.xlu0 2
  %1013 = vperm.xlu0 %1012, %v44
  %v1014 = vpop.permute.xlu0 %1013
  %1016 = vset.pattern.permute.xlu0 2
  %1017 = vperm.xlu0 %1016, %v45
  %v1018 = vpop.permute.xlu0 %1017
  %1020 = vset.pattern.permute.xlu0 2
  %1021 = vperm.xlu0 %1020, %v46
  %v1022 = vpop.permute.xlu0 %1021
  %1024 = vset.pattern.permute.xlu0 2
  %1025 = vperm.xlu0 %1024, %v47
  %v1026 = vpop.permute.xlu0 %1025
  %1028 = vset.pattern.permute.xlu0 2
  %1029 = vperm.xlu0 %1028, %v48
  %v1030 = vpop.permute.xlu0 %1029
  %1032 = vset.pattern.permute.xlu0 2
  %1033 = vperm.xlu0 %1032, %v49
  %v1034 = vpop.permute.xlu0 %1033
  %1036 = vset.pattern.permute.xlu0 2
  %1037 = vperm.xlu0 %1036, %v50
  %v1038 = vpop.permute.xlu0 %1037
  %1040 = vset.pattern.permute.xlu0 2
  %1041 = vperm.xlu0 %1040, %v51
  %v1042 = vpop.permute.xlu0 %1041
  %1044 = vset.pattern.permute.xlu0 2
  %1045 = vperm.xlu0 %1044, %v52
  %v1046 = vpop.permute.xlu0 %1045
  %1048 = vset.pattern.permute.xlu0 2
  %1049 = vperm.xlu0 %1048, %v53
  %v1050 = vpop.permute.xlu0 %1049
  %1052 = vset.pattern.permute.xlu0 2
  %1053 = vperm.xlu0 %1052, %v54
  %v1054 = vpop.permute.xlu0 %1053
  %1056 = vset.pattern.permute.xlu0 2
  %1057 = vperm.xlu0 %1056, %v55
  %v1058 = vpop.permute.xlu0 %1057
  %1060 = vset.pattern.permute.xlu0 2
  %1061 = vperm.xlu0 %1060, %v56
  %v1062 = vpop.permute.xlu0 %1061
  %1064 = vset.pattern.permute.xlu0 2
  %1065 = vperm.xlu0 %1064, %v57
  %v1066 = vpop.permute.xlu0 %1065
  %1068 = vset.pattern.permute.xlu0 2
  %1069 = vperm.xlu0 %1068, %v58
  %v1070 = vpop.permute.xlu0 %1069
  %1072 = vset.pattern.permute.xlu0 2
  %1073 = vperm.xlu0 %1072, %v59
  %v1074 = vpop.permute.xlu0 %1073
  %1076 = vset.pattern.permute.xlu0 2
  %1077 = vperm.xlu0 %1076, %v60
  %v1078 = vpop.permute.xlu0 %1077
  %1080 = vset.pattern.permute.xlu0 2
  %1081 = vperm.xlu0 %1080, %v61
  %v1082 = vpop.permute.xlu0 %1081
  %1084 = vset.pattern.permute.xlu0 2
  %1085 = vperm.xlu0 %1084, %v62
  %v1086 = vpop.permute.xlu0 %1085
  %1088 = vset.pattern.permute.xlu0 2
  %1089 = vperm.xlu0 %1088, %v63
  %v1090 = vpop.permute.xlu0 %1089
  %1092 = vset.pattern.permute.xlu0 2
  %1093 = vperm.xlu0 %1092, %v64
  %v1094 = vpop.permute.xlu0 %1093
  %1096 = vset.pattern.permute.xlu0 2
  %1097 = vperm.xlu0 %1096, %v65
  %v1098 = vpop.permute.xlu0 %1097
  %1100 = vset.pattern.permute.xlu0 2
  %1101 = vperm.xlu0 %1100, %v66
  %v1102 = vpop.permute.xlu0 %1101
  %1104 = vset.pattern.permute.xlu0 2
  %1105 = vperm.xlu0 %1104, %v67
  %v1106 = vpop.permute.xlu0 %1105
  %1108 = vset.pattern.permute.xlu0 2
  %1109 = vperm.xlu0 %1108, %v68
  %v1110 = vpop.permute.xlu0 %1109
  %1112 = vset.pattern.permute.xlu0 2
  %1113 = vperm.xlu0 %1112, %v69
  %v1114 = vpop.permute.xlu0 %1113
  %1116 = vset.pattern.permute.xlu0 2
  %1117 = vperm.xlu0 %1116, %v70
  %v1118 = vpop.permute.xlu0 %1117
  %1120 = vset.pattern.permute.xlu0 2
  %1121 = vperm.xlu0 %1120, %v71
  %v1122 = vpop.permute.xlu0 %1121
  %1124 = vset.pattern.permute.xlu0 2
  %1125 = vperm.xlu0 %1124, %v72
  %v1126 = vpop.permute.xlu0 %1125
  %1128 = vset.pattern.permute.xlu0 2
  %1129 = vperm.xlu0 %1128, %v73
  %v1130 = vpop.permute.xlu0 %1129
  %1132 = vset.pattern.permute.xlu0 2
  %1133 = vperm.xlu0 %1132, %v74
  %v1134 = vpop.permute.xlu0 %1133
  %1136 = vset.pattern.permute.xlu0 2
  %1137 = vperm.xlu0 %1136, %v75
  %v1138 = vpop.permute.xlu0 %1137
  %1140 = vset.pattern.permute.xlu0 2
  %1141 = vperm.xlu0 %1140, %v76
  %v1142 = vpop.permute.xlu0 %1141
  %1144 = vset.pattern.permute.xlu0 2
  %1145 = vperm.xlu0 %1144, %v77
  %v1146 = vpop.permute.xlu0 %1145
  %1148 = vset.pattern.permute.xlu0 2
  %1149 = vperm.xlu0 %1148, %v78
  %v1150 = vpop.permute.xlu0 %1149
  %1152 = vset.pattern.permute.xlu0 2
  %1153 = vperm.xlu0 %1152, %v79
  %v1154 = vpop.permute.xlu0 %1153
  %1156 = vset.pattern.permute.xlu0 2
  %1157 = vperm.xlu0 %1156, %v80
  %v1158 = vpop.permute.xlu0 %1157
  %1160 = vset.pattern.permute.xlu0 2
  %1161 = vperm.xlu0 %1160, %v81
  %v1162 = vpop.permute.xlu0 %1161
  %1164 = vset.pattern.permute.xlu0 2
  %1165 = vperm.xlu0 %1164, %v82
  %v1166 = vpop.permute.xlu0 %1165
  %1168 = vset.pattern.permute.xlu0 2
  %1169 = vperm.xlu0 %1168, %v83
  %v1170 = vpop.permute.xlu0 %1169
  %1172 = vset.pattern.permute.xlu0 2
  %1173 = vperm.xlu0 %1172, %v84
  %v1174 = vpop.permute.xlu0 %1173
  %1176 = vset.pattern.permute.xlu0 2
  %1177 = vperm.xlu0 %1176, %v85
  %v1178 = vpop.permute.xlu0 %1177
  %1180 = vset.pattern.permute.xlu0 2
  %1181 = vperm.xlu0 %1180, %v86
  %v1182 = vpop.permute.xlu0 %1181
  %1184 = vset.pattern.permute.xlu0 2
  %1185 = vperm.xlu0 %1184, %v87
  %v1186 = vpop.permute.xlu0 %1185
  %1188 = vset.pattern.permute.xlu0 2
  %1189 = vperm.xlu0 %1188, %v88
  %v1190 = vpop.permute.xlu0 %1189
  %1192 = vset.pattern.permute.xlu0 2
  %1193 = vperm.xlu0 %1192, %v89
  %v1194 = vpop.permute.xlu0 %1193
  %v1196 = vlaneseq
  %v1197 = vshrl.u32 %v1196, 7
  %v1198 = vsub.s32 0, %v1197
  %v1199 = vrot.slane %v939, %v1198
  %v1200 = vmul.f32 %v942, %v1199
  %v1201 = vmul.f32 %v946, %v1199
  %v1202 = vmul.f32 %v950, %v1199
  %v1203 = vmul.f32 %v954, %v1199
  %v1204 = vmul.f32 %v958, %v1199
  %v1205 = vmul.f32 %v962, %v1199
  %v1206 = vmul.f32 %v966, %v1199
  %v1207 = vmul.f32 %v970, %v1199
  %v1208 = vmul.f32 %v974, %v1199
  %v1209 = vmul.f32 %v978, %v1199
  %v1210 = vmul.f32 %v982, %v1199
  %v1211 = vmul.f32 %v986, %v1199
  %v1212 = vmul.f32 %v990, %v1199
  %v1213 = vmul.f32 %v994, %v1199
  %v1214 = vmul.f32 %v998, %v1199
  %v1215 = vmul.f32 %v1002, %v1199
  %v1216 = vmul.f32 %v1006, %v1199
  %v1217 = vmul.f32 %v1010, %v1199
  %v1218 = vmul.f32 %v1014, %v1199
  %v1219 = vmul.f32 %v1018, %v1199
  %v1220 = vmul.f32 %v1022, %v1199
  %v1221 = vmul.f32 %v1026, %v1199
  %v1222 = vmul.f32 %v1030, %v1199
  %v1223 = vmul.f32 %v1034, %v1199
  %v1224 = vmul.f32 %v1038, %v1199
  %v1225 = vmul.f32 %v1042, %v1199
  %v1226 = vmul.f32 %v1046, %v1199
  %v1227 = vmul.f32 %v1050, %v1199
  %v1228 = vmul.f32 %v1054, %v1199
  %v1229 = vmul.f32 %v1058, %v1199
  %v1230 = vmul.f32 %v1062, %v1199
  %v1231 = vmul.f32 %v1066, %v1199
  %v1232 = vmul.f32 %v1070, %v1199
  %v1233 = vmul.f32 %v1074, %v1199
  %v1234 = vmul.f32 %v1078, %v1199
  %v1235 = vmul.f32 %v1082, %v1199
  %v1236 = vmul.f32 %v1086, %v1199
  %v1237 = vmul.f32 %v1090, %v1199
  %v1238 = vmul.f32 %v1094, %v1199
  %v1239 = vmul.f32 %v1098, %v1199
  %v1240 = vmul.f32 %v1102, %v1199
  %v1241 = vmul.f32 %v1106, %v1199
  %v1242 = vmul.f32 %v1110, %v1199
  %v1243 = vmul.f32 %v1114, %v1199
  %v1244 = vmul.f32 %v1118, %v1199
  %v1245 = vmul.f32 %v1122, %v1199
  %v1246 = vmul.f32 %v1126, %v1199
  %v1247 = vmul.f32 %v1130, %v1199
  %v1248 = vmul.f32 %v1134, %v1199
  %v1249 = vmul.f32 %v1138, %v1199
  %v1250 = vmul.f32 %v1142, %v1199
  %v1251 = vmul.f32 %v1146, %v1199
  %v1252 = vmul.f32 %v1150, %v1199
  %v1253 = vmul.f32 %v1154, %v1199
  %v1254 = vmul.f32 %v1158, %v1199
  %v1255 = vmul.f32 %v1162, %v1199
  %v1256 = vmul.f32 %v1166, %v1199
  %v1257 = vmul.f32 %v1170, %v1199
  %v1258 = vmul.f32 %v1174, %v1199
  %v1259 = vmul.f32 %v1178, %v1199
  %v1260 = vmul.f32 %v1182, %v1199
  %v1261 = vmul.f32 %v1186, %v1199
  %v1262 = vmul.f32 %v1190, %v1199
  %v1263 = vmul.f32 %v1194, %v1199
  %v1264 = vadd.f32 %v875, %v1200
  %v1265 = vadd.f32 %v876, %v1201
  %v1266 = vadd.f32 %v877, %v1202
  %v1267 = vadd.f32 %v878, %v1203
  %v1268 = vadd.f32 %v879, %v1204
  %v1269 = vadd.f32 %v880, %v1205
  %v1270 = vadd.f32 %v881, %v1206
  %v1271 = vadd.f32 %v882, %v1207
  %v1272 = vadd.f32 %v883, %v1208
  %v1273 = vadd.f32 %v884, %v1209
  %v1274 = vadd.f32 %v885, %v1210
  %v1275 = vadd.f32 %v886, %v1211
  %v1276 = vadd.f32 %v887, %v1212
  %v1277 = vadd.f32 %v888, %v1213
  %v1278 = vadd.f32 %v889, %v1214
  %v1279 = vadd.f32 %v890, %v1215
  %v1280 = vadd.f32 %v891, %v1216
  %v1281 = vadd.f32 %v892, %v1217
  %v1282 = vadd.f32 %v893, %v1218
  %v1283 = vadd.f32 %v894, %v1219
  %v1284 = vadd.f32 %v895, %v1220
  %v1285 = vadd.f32 %v896, %v1221
  %v1286 = vadd.f32 %v897, %v1222
  %v1287 = vadd.f32 %v898, %v1223
  %v1288 = vadd.f32 %v899, %v1224
  %v1289 = vadd.f32 %v900, %v1225
  %v1290 = vadd.f32 %v901, %v1226
  %v1291 = vadd.f32 %v902, %v1227
  %v1292 = vadd.f32 %v903, %v1228
  %v1293 = vadd.f32 %v904, %v1229
  %v1294 = vadd.f32 %v905, %v1230
  %v1295 = vadd.f32 %v906, %v1231
  %v1296 = vadd.f32 %v907, %v1232
  %v1297 = vadd.f32 %v908, %v1233
  %v1298 = vadd.f32 %v909, %v1234
  %v1299 = vadd.f32 %v910, %v1235
  %v1300 = vadd.f32 %v911, %v1236
  %v1301 = vadd.f32 %v912, %v1237
  %v1302 = vadd.f32 %v913, %v1238
  %v1303 = vadd.f32 %v914, %v1239
  %v1304 = vadd.f32 %v915, %v1240
  %v1305 = vadd.f32 %v916, %v1241
  %v1306 = vadd.f32 %v917, %v1242
  %v1307 = vadd.f32 %v918, %v1243
  %v1308 = vadd.f32 %v919, %v1244
  %v1309 = vadd.f32 %v920, %v1245
  %v1310 = vadd.f32 %v921, %v1246
  %v1311 = vadd.f32 %v922, %v1247
  %v1312 = vadd.f32 %v923, %v1248
  %v1313 = vadd.f32 %v924, %v1249
  %v1314 = vadd.f32 %v925, %v1250
  %v1315 = vadd.f32 %v926, %v1251
  %v1316 = vadd.f32 %v927, %v1252
  %v1317 = vadd.f32 %v928, %v1253
  %v1318 = vadd.f32 %v929, %v1254
  %v1319 = vadd.f32 %v930, %v1255
  %v1320 = vadd.f32 %v931, %v1256
  %v1321 = vadd.f32 %v932, %v1257
  %v1322 = vadd.f32 %v933, %v1258
  %v1323 = vadd.f32 %v934, %v1259
  %v1324 = vadd.f32 %v935, %v1260
  %v1325 = vadd.f32 %v936, %v1261
  %v1326 = vadd.f32 %v937, %v1262
  %v1327 = vadd.f32 %v938, %v1263
  %v1328 = vld [vmem:[%s3 + $0x3] sm:$0x1]
  %1329 = vset.pattern.permute.xlu0 3
  %1330 = vperm.xlu0 %1329, %v26
  %v1331 = vpop.permute.xlu0 %1330
  %1333 = vset.pattern.permute.xlu0 3
  %1334 = vperm.xlu0 %1333, %v27
  %v1335 = vpop.permute.xlu0 %1334
  %1337 = vset.pattern.permute.xlu0 3
  %1338 = vperm.xlu0 %1337, %v28
  %v1339 = vpop.permute.xlu0 %1338
  %1341 = vset.pattern.permute.xlu0 3
  %1342 = vperm.xlu0 %1341, %v29
  %v1343 = vpop.permute.xlu0 %1342
  %1345 = vset.pattern.permute.xlu0 3
  %1346 = vperm.xlu0 %1345, %v30
  %v1347 = vpop.permute.xlu0 %1346
  %1349 = vset.pattern.permute.xlu0 3
  %1350 = vperm.xlu0 %1349, %v31
  %v1351 = vpop.permute.xlu0 %1350
  %1353 = vset.pattern.permute.xlu0 3
  %1354 = vperm.xlu0 %1353, %v32
  %v1355 = vpop.permute.xlu0 %1354
  %1357 = vset.pattern.permute.xlu0 3
  %1358 = vperm.xlu0 %1357, %v33
  %v1359 = vpop.permute.xlu0 %1358
  %1361 = vset.pattern.permute.xlu0 3
  %1362 = vperm.xlu0 %1361, %v34
  %v1363 = vpop.permute.xlu0 %1362
  %1365 = vset.pattern.permute.xlu0 3
  %1366 = vperm.xlu0 %1365, %v35
  %v1367 = vpop.permute.xlu0 %1366
  %1369 = vset.pattern.permute.xlu0 3
  %1370 = vperm.xlu0 %1369, %v36
  %v1371 = vpop.permute.xlu0 %1370
  %1373 = vset.pattern.permute.xlu0 3
  %1374 = vperm.xlu0 %1373, %v37
  %v1375 = vpop.permute.xlu0 %1374
  %1377 = vset.pattern.permute.xlu0 3
  %1378 = vperm.xlu0 %1377, %v38
  %v1379 = vpop.permute.xlu0 %1378
  %1381 = vset.pattern.permute.xlu0 3
  %1382 = vperm.xlu0 %1381, %v39
  %v1383 = vpop.permute.xlu0 %1382
  %1385 = vset.pattern.permute.xlu0 3
  %1386 = vperm.xlu0 %1385, %v40
  %v1387 = vpop.permute.xlu0 %1386
  %1389 = vset.pattern.permute.xlu0 3
  %1390 = vperm.xlu0 %1389, %v41
  %v1391 = vpop.permute.xlu0 %1390
  %1393 = vset.pattern.permute.xlu0 3
  %1394 = vperm.xlu0 %1393, %v42
  %v1395 = vpop.permute.xlu0 %1394
  %1397 = vset.pattern.permute.xlu0 3
  %1398 = vperm.xlu0 %1397, %v43
  %v1399 = vpop.permute.xlu0 %1398
  %1401 = vset.pattern.permute.xlu0 3
  %1402 = vperm.xlu0 %1401, %v44
  %v1403 = vpop.permute.xlu0 %1402
  %1405 = vset.pattern.permute.xlu0 3
  %1406 = vperm.xlu0 %1405, %v45
  %v1407 = vpop.permute.xlu0 %1406
  %1409 = vset.pattern.permute.xlu0 3
  %1410 = vperm.xlu0 %1409, %v46
  %v1411 = vpop.permute.xlu0 %1410
  %1413 = vset.pattern.permute.xlu0 3
  %1414 = vperm.xlu0 %1413, %v47
  %v1415 = vpop.permute.xlu0 %1414
  %1417 = vset.pattern.permute.xlu0 3
  %1418 = vperm.xlu0 %1417, %v48
  %v1419 = vpop.permute.xlu0 %1418
  %1421 = vset.pattern.permute.xlu0 3
  %1422 = vperm.xlu0 %1421, %v49
  %v1423 = vpop.permute.xlu0 %1422
  %1425 = vset.pattern.permute.xlu0 3
  %1426 = vperm.xlu0 %1425, %v50
  %v1427 = vpop.permute.xlu0 %1426
  %1429 = vset.pattern.permute.xlu0 3
  %1430 = vperm.xlu0 %1429, %v51
  %v1431 = vpop.permute.xlu0 %1430
  %1433 = vset.pattern.permute.xlu0 3
  %1434 = vperm.xlu0 %1433, %v52
  %v1435 = vpop.permute.xlu0 %1434
  %1437 = vset.pattern.permute.xlu0 3
  %1438 = vperm.xlu0 %1437, %v53
  %v1439 = vpop.permute.xlu0 %1438
  %1441 = vset.pattern.permute.xlu0 3
  %1442 = vperm.xlu0 %1441, %v54
  %v1443 = vpop.permute.xlu0 %1442
  %1445 = vset.pattern.permute.xlu0 3
  %1446 = vperm.xlu0 %1445, %v55
  %v1447 = vpop.permute.xlu0 %1446
  %1449 = vset.pattern.permute.xlu0 3
  %1450 = vperm.xlu0 %1449, %v56
  %v1451 = vpop.permute.xlu0 %1450
  %1453 = vset.pattern.permute.xlu0 3
  %1454 = vperm.xlu0 %1453, %v57
  %v1455 = vpop.permute.xlu0 %1454
  %1457 = vset.pattern.permute.xlu0 3
  %1458 = vperm.xlu0 %1457, %v58
  %v1459 = vpop.permute.xlu0 %1458
  %1461 = vset.pattern.permute.xlu0 3
  %1462 = vperm.xlu0 %1461, %v59
  %v1463 = vpop.permute.xlu0 %1462
  %1465 = vset.pattern.permute.xlu0 3
  %1466 = vperm.xlu0 %1465, %v60
  %v1467 = vpop.permute.xlu0 %1466
  %1469 = vset.pattern.permute.xlu0 3
  %1470 = vperm.xlu0 %1469, %v61
  %v1471 = vpop.permute.xlu0 %1470
  %1473 = vset.pattern.permute.xlu0 3
  %1474 = vperm.xlu0 %1473, %v62
  %v1475 = vpop.permute.xlu0 %1474
  %1477 = vset.pattern.permute.xlu0 3
  %1478 = vperm.xlu0 %1477, %v63
  %v1479 = vpop.permute.xlu0 %1478
  %1481 = vset.pattern.permute.xlu0 3
  %1482 = vperm.xlu0 %1481, %v64
  %v1483 = vpop.permute.xlu0 %1482
  %1485 = vset.pattern.permute.xlu0 3
  %1486 = vperm.xlu0 %1485, %v65
  %v1487 = vpop.permute.xlu0 %1486
  %1489 = vset.pattern.permute.xlu0 3
  %1490 = vperm.xlu0 %1489, %v66
  %v1491 = vpop.permute.xlu0 %1490
  %1493 = vset.pattern.permute.xlu0 3
  %1494 = vperm.xlu0 %1493, %v67
  %v1495 = vpop.permute.xlu0 %1494
  %1497 = vset.pattern.permute.xlu0 3
  %1498 = vperm.xlu0 %1497, %v68
  %v1499 = vpop.permute.xlu0 %1498
  %1501 = vset.pattern.permute.xlu0 3
  %1502 = vperm.xlu0 %1501, %v69
  %v1503 = vpop.permute.xlu0 %1502
  %1505 = vset.pattern.permute.xlu0 3
  %1506 = vperm.xlu0 %1505, %v70
  %v1507 = vpop.permute.xlu0 %1506
  %1509 = vset.pattern.permute.xlu0 3
  %1510 = vperm.xlu0 %1509, %v71
  %v1511 = vpop.permute.xlu0 %1510
  %1513 = vset.pattern.permute.xlu0 3
  %1514 = vperm.xlu0 %1513, %v72
  %v1515 = vpop.permute.xlu0 %1514
  %1517 = vset.pattern.permute.xlu0 3
  %1518 = vperm.xlu0 %1517, %v73
  %v1519 = vpop.permute.xlu0 %1518
  %1521 = vset.pattern.permute.xlu0 3
  %1522 = vperm.xlu0 %1521, %v74
  %v1523 = vpop.permute.xlu0 %1522
  %1525 = vset.pattern.permute.xlu0 3
  %1526 = vperm.xlu0 %1525, %v75
  %v1527 = vpop.permute.xlu0 %1526
  %1529 = vset.pattern.permute.xlu0 3
  %1530 = vperm.xlu0 %1529, %v76
  %v1531 = vpop.permute.xlu0 %1530
  %1533 = vset.pattern.permute.xlu0 3
  %1534 = vperm.xlu0 %1533, %v77
  %v1535 = vpop.permute.xlu0 %1534
  %1537 = vset.pattern.permute.xlu0 3
  %1538 = vperm.xlu0 %1537, %v78
  %v1539 = vpop.permute.xlu0 %1538
  %1541 = vset.pattern.permute.xlu0 3
  %1542 = vperm.xlu0 %1541, %v79
  %v1543 = vpop.permute.xlu0 %1542
  %1545 = vset.pattern.permute.xlu0 3
  %1546 = vperm.xlu0 %1545, %v80
  %v1547 = vpop.permute.xlu0 %1546
  %1549 = vset.pattern.permute.xlu0 3
  %1550 = vperm.xlu0 %1549, %v81
  %v1551 = vpop.permute.xlu0 %1550
  %1553 = vset.pattern.permute.xlu0 3
  %1554 = vperm.xlu0 %1553, %v82
  %v1555 = vpop.permute.xlu0 %1554
  %1557 = vset.pattern.permute.xlu0 3
  %1558 = vperm.xlu0 %1557, %v83
  %v1559 = vpop.permute.xlu0 %1558
  %1561 = vset.pattern.permute.xlu0 3
  %1562 = vperm.xlu0 %1561, %v84
  %v1563 = vpop.permute.xlu0 %1562
  %1565 = vset.pattern.permute.xlu0 3
  %1566 = vperm.xlu0 %1565, %v85
  %v1567 = vpop.permute.xlu0 %1566
  %1569 = vset.pattern.permute.xlu0 3
  %1570 = vperm.xlu0 %1569, %v86
  %v1571 = vpop.permute.xlu0 %1570
  %1573 = vset.pattern.permute.xlu0 3
  %1574 = vperm.xlu0 %1573, %v87
  %v1575 = vpop.permute.xlu0 %1574
  %1577 = vset.pattern.permute.xlu0 3
  %1578 = vperm.xlu0 %1577, %v88
  %v1579 = vpop.permute.xlu0 %1578
  %1581 = vset.pattern.permute.xlu0 3
  %1582 = vperm.xlu0 %1581, %v89
  %v1583 = vpop.permute.xlu0 %1582
  %v1585 = vlaneseq
  %v1586 = vshrl.u32 %v1585, 7
  %v1587 = vsub.s32 0, %v1586
  %v1588 = vrot.slane %v1328, %v1587
  %v1589 = vmul.f32 %v1331, %v1588
  %v1590 = vmul.f32 %v1335, %v1588
  %v1591 = vmul.f32 %v1339, %v1588
  %v1592 = vmul.f32 %v1343, %v1588
  %v1593 = vmul.f32 %v1347, %v1588
  %v1594 = vmul.f32 %v1351, %v1588
  %v1595 = vmul.f32 %v1355, %v1588
  %v1596 = vmul.f32 %v1359, %v1588
  %v1597 = vmul.f32 %v1363, %v1588
  %v1598 = vmul.f32 %v1367, %v1588
  %v1599 = vmul.f32 %v1371, %v1588
  %v1600 = vmul.f32 %v1375, %v1588
  %v1601 = vmul.f32 %v1379, %v1588
  %v1602 = vmul.f32 %v1383, %v1588
  %v1603 = vmul.f32 %v1387, %v1588
  %v1604 = vmul.f32 %v1391, %v1588
  %v1605 = vmul.f32 %v1395, %v1588
  %v1606 = vmul.f32 %v1399, %v1588
  %v1607 = vmul.f32 %v1403, %v1588
  %v1608 = vmul.f32 %v1407, %v1588
  %v1609 = vmul.f32 %v1411, %v1588
  %v1610 = vmul.f32 %v1415, %v1588
  %v1611 = vmul.f32 %v1419, %v1588
  %v1612 = vmul.f32 %v1423, %v1588
  %v1613 = vmul.f32 %v1427, %v1588
  %v1614 = vmul.f32 %v1431, %v1588
  %v1615 = vmul.f32 %v1435, %v1588
  %v1616 = vmul.f32 %v1439, %v1588
  %v1617 = vmul.f32 %v1443, %v1588
  %v1618 = vmul.f32 %v1447, %v1588
  %v1619 = vmul.f32 %v1451, %v1588
  %v1620 = vmul.f32 %v1455, %v1588
  %v1621 = vmul.f32 %v1459, %v1588
  %v1622 = vmul.f32 %v1463, %v1588
  %v1623 = vmul.f32 %v1467, %v1588
  %v1624 = vmul.f32 %v1471, %v1588
  %v1625 = vmul.f32 %v1475, %v1588
  %v1626 = vmul.f32 %v1479, %v1588
  %v1627 = vmul.f32 %v1483, %v1588
  %v1628 = vmul.f32 %v1487, %v1588
  %v1629 = vmul.f32 %v1491, %v1588
  %v1630 = vmul.f32 %v1495, %v1588
  %v1631 = vmul.f32 %v1499, %v1588
  %v1632 = vmul.f32 %v1503, %v1588
  %v1633 = vmul.f32 %v1507, %v1588
  %v1634 = vmul.f32 %v1511, %v1588
  %v1635 = vmul.f32 %v1515, %v1588
  %v1636 = vmul.f32 %v1519, %v1588
  %v1637 = vmul.f32 %v1523, %v1588
  %v1638 = vmul.f32 %v1527, %v1588
  %v1639 = vmul.f32 %v1531, %v1588
  %v1640 = vmul.f32 %v1535, %v1588
  %v1641 = vmul.f32 %v1539, %v1588
  %v1642 = vmul.f32 %v1543, %v1588
  %v1643 = vmul.f32 %v1547, %v1588
  %v1644 = vmul.f32 %v1551, %v1588
  %v1645 = vmul.f32 %v1555, %v1588
  %v1646 = vmul.f32 %v1559, %v1588
  %v1647 = vmul.f32 %v1563, %v1588
  %v1648 = vmul.f32 %v1567, %v1588
  %v1649 = vmul.f32 %v1571, %v1588
  %v1650 = vmul.f32 %v1575, %v1588
  %v1651 = vmul.f32 %v1579, %v1588
  %v1652 = vmul.f32 %v1583, %v1588
  %v1653 = vadd.f32 %v1264, %v1589
  %v1654 = vadd.f32 %v1265, %v1590
  %v1655 = vadd.f32 %v1266, %v1591
  %v1656 = vadd.f32 %v1267, %v1592
  %v1657 = vadd.f32 %v1268, %v1593
  %v1658 = vadd.f32 %v1269, %v1594
  %v1659 = vadd.f32 %v1270, %v1595
  %v1660 = vadd.f32 %v1271, %v1596
  %v1661 = vadd.f32 %v1272, %v1597
  %v1662 = vadd.f32 %v1273, %v1598
  %v1663 = vadd.f32 %v1274, %v1599
  %v1664 = vadd.f32 %v1275, %v1600
  %v1665 = vadd.f32 %v1276, %v1601
  %v1666 = vadd.f32 %v1277, %v1602
  %v1667 = vadd.f32 %v1278, %v1603
  %v1668 = vadd.f32 %v1279, %v1604
  %v1669 = vadd.f32 %v1280, %v1605
  %v1670 = vadd.f32 %v1281, %v1606
  %v1671 = vadd.f32 %v1282, %v1607
  %v1672 = vadd.f32 %v1283, %v1608
  %v1673 = vadd.f32 %v1284, %v1609
  %v1674 = vadd.f32 %v1285, %v1610
  %v1675 = vadd.f32 %v1286, %v1611
  %v1676 = vadd.f32 %v1287, %v1612
  %v1677 = vadd.f32 %v1288, %v1613
  %v1678 = vadd.f32 %v1289, %v1614
  %v1679 = vadd.f32 %v1290, %v1615
  %v1680 = vadd.f32 %v1291, %v1616
  %v1681 = vadd.f32 %v1292, %v1617
  %v1682 = vadd.f32 %v1293, %v1618
  %v1683 = vadd.f32 %v1294, %v1619
  %v1684 = vadd.f32 %v1295, %v1620
  %v1685 = vadd.f32 %v1296, %v1621
  %v1686 = vadd.f32 %v1297, %v1622
  %v1687 = vadd.f32 %v1298, %v1623
  %v1688 = vadd.f32 %v1299, %v1624
  %v1689 = vadd.f32 %v1300, %v1625
  %v1690 = vadd.f32 %v1301, %v1626
  %v1691 = vadd.f32 %v1302, %v1627
  %v1692 = vadd.f32 %v1303, %v1628
  %v1693 = vadd.f32 %v1304, %v1629
  %v1694 = vadd.f32 %v1305, %v1630
  %v1695 = vadd.f32 %v1306, %v1631
  %v1696 = vadd.f32 %v1307, %v1632
  %v1697 = vadd.f32 %v1308, %v1633
  %v1698 = vadd.f32 %v1309, %v1634
  %v1699 = vadd.f32 %v1310, %v1635
  %v1700 = vadd.f32 %v1311, %v1636
  %v1701 = vadd.f32 %v1312, %v1637
  %v1702 = vadd.f32 %v1313, %v1638
  %v1703 = vadd.f32 %v1314, %v1639
  %v1704 = vadd.f32 %v1315, %v1640
  %v1705 = vadd.f32 %v1316, %v1641
  %v1706 = vadd.f32 %v1317, %v1642
  %v1707 = vadd.f32 %v1318, %v1643
  %v1708 = vadd.f32 %v1319, %v1644
  %v1709 = vadd.f32 %v1320, %v1645
  %v1710 = vadd.f32 %v1321, %v1646
  %v1711 = vadd.f32 %v1322, %v1647
  %v1712 = vadd.f32 %v1323, %v1648
  %v1713 = vadd.f32 %v1324, %v1649
  %v1714 = vadd.f32 %v1325, %v1650
  %v1715 = vadd.f32 %v1326, %v1651
  %v1716 = vadd.f32 %v1327, %v1652
  %v1717 = vmax.f32 %v1653, 0.0
  %v1718 = vmax.f32 %v1654, 0.0
  %v1719 = vmax.f32 %v1655, 0.0
  %v1720 = vmax.f32 %v1656, 0.0
  %v1721 = vmax.f32 %v1657, 0.0
  %v1722 = vmax.f32 %v1658, 0.0
  %v1723 = vmax.f32 %v1659, 0.0
  %v1724 = vmax.f32 %v1660, 0.0
  %v1725 = vmax.f32 %v1661, 0.0
  %v1726 = vmax.f32 %v1662, 0.0
  %v1727 = vmax.f32 %v1663, 0.0
  %v1728 = vmax.f32 %v1664, 0.0
  %v1729 = vmax.f32 %v1665, 0.0
  %v1730 = vmax.f32 %v1666, 0.0
  %v1731 = vmax.f32 %v1667, 0.0
  %v1732 = vmax.f32 %v1668, 0.0
  %v1733 = vmax.f32 %v1669, 0.0
  %v1734 = vmax.f32 %v1670, 0.0
  %v1735 = vmax.f32 %v1671, 0.0
  %v1736 = vmax.f32 %v1672, 0.0
  %v1737 = vmax.f32 %v1673, 0.0
  %v1738 = vmax.f32 %v1674, 0.0
  %v1739 = vmax.f32 %v1675, 0.0
  %v1740 = vmax.f32 %v1676, 0.0
  %v1741 = vmax.f32 %v1677, 0.0
  %v1742 = vmax.f32 %v1678, 0.0
  %v1743 = vmax.f32 %v1679, 0.0
  %v1744 = vmax.f32 %v1680, 0.0
  %v1745 = vmax.f32 %v1681, 0.0
  %v1746 = vmax.f32 %v1682, 0.0
  %v1747 = vmax.f32 %v1683, 0.0
  %v1748 = vmax.f32 %v1684, 0.0
  %v1749 = vmax.f32 %v1685, 0.0
  %v1750 = vmax.f32 %v1686, 0.0
  %v1751 = vmax.f32 %v1687, 0.0
  %v1752 = vmax.f32 %v1688, 0.0
  %v1753 = vmax.f32 %v1689, 0.0
  %v1754 = vmax.f32 %v1690, 0.0
  %v1755 = vmax.f32 %v1691, 0.0
  %v1756 = vmax.f32 %v1692, 0.0
  %v1757 = vmax.f32 %v1693, 0.0
  %v1758 = vmax.f32 %v1694, 0.0
  %v1759 = vmax.f32 %v1695, 0.0
  %v1760 = vmax.f32 %v1696, 0.0
  %v1761 = vmax.f32 %v1697, 0.0
  %v1762 = vmax.f32 %v1698, 0.0
  %v1763 = vmax.f32 %v1699, 0.0
  %v1764 = vmax.f32 %v1700, 0.0
  %v1765 = vmax.f32 %v1701, 0.0
  %v1766 = vmax.f32 %v1702, 0.0
  %v1767 = vmax.f32 %v1703, 0.0
  %v1768 = vmax.f32 %v1704, 0.0
  %v1769 = vmax.f32 %v1705, 0.0
  %v1770 = vmax.f32 %v1706, 0.0
  %v1771 = vmax.f32 %v1707, 0.0
  %v1772 = vmax.f32 %v1708, 0.0
  %v1773 = vmax.f32 %v1709, 0.0
  %v1774 = vmax.f32 %v1710, 0.0
  %v1775 = vmax.f32 %v1711, 0.0
  %v1776 = vmax.f32 %v1712, 0.0
  %v1777 = vmax.f32 %v1713, 0.0
  %v1778 = vmax.f32 %v1714, 0.0
  %v1779 = vmax.f32 %v1715, 0.0
  %v1780 = vmax.f32 %v1716, 0.0
  %v1781 = vld [vmem:[%s1] sm:$0xff]
  %v1782 = vld [vmem:[%s1 + $0x8] sm:$0xff]
  %v1783 = vld [vmem:[%s1 + $0x10] sm:$0xff]
  %v1784 = vld [vmem:[%s1 + $0x18] sm:$0xff]
  %v1785 = vld [vmem:[%s1 + $0x20] sm:$0xff]
  %v1786 = vld [vmem:[%s1 + $0x28] sm:$0xff]
  %v1787 = vld [vmem:[%s1 + $0x30] sm:$0xff]
  %v1788 = vld [vmem:[%s1 + $0x38] sm:$0xff]
  %v1789 = vld [vmem:[%s1 + $0x40] sm:$0xff]
  %v1790 = vld [vmem:[%s1 + $0x48] sm:$0xff]
  %v1791 = vld [vmem:[%s1 + $0x50] sm:$0xff]
  %v1792 = vld [vmem:[%s1 + $0x58] sm:$0xff]
  %v1793 = vld [vmem:[%s1 + $0x60] sm:$0xff]
  %v1794 = vld [vmem:[%s1 + $0x68] sm:$0xff]
  %v1795 = vld [vmem:[%s1 + $0x70] sm:$0xff]
  %v1796 = vld [vmem:[%s1 + $0x78] sm:$0xff]
  %v1797 = vld [vmem:[%s1 + $0x80] sm:$0xff]
  %v1798 = vld [vmem:[%s1 + $0x88] sm:$0xff]
  %v1799 = vld [vmem:[%s1 + $0x90] sm:$0xff]
  %v1800 = vld [vmem:[%s1 + $0x98] sm:$0xff]
  %v1801 = vld [vmem:[%s1 + $0xa0] sm:$0xff]
  %v1802 = vld [vmem:[%s1 + $0xa8] sm:$0xff]
  %v1803 = vld [vmem:[%s1 + $0xb0] sm:$0xff]
  %v1804 = vld [vmem:[%s1 + $0xb8] sm:$0xff]
  %v1805 = vld [vmem:[%s1 + $0xc0] sm:$0xff]
  %v1806 = vld [vmem:[%s1 + $0xc8] sm:$0xff]
  %v1807 = vld [vmem:[%s1 + $0xd0] sm:$0xff]
  %v1808 = vld [vmem:[%s1 + $0xd8] sm:$0xff]
  %v1809 = vld [vmem:[%s1 + $0xe0] sm:$0xff]
  %v1810 = vld [vmem:[%s1 + $0xe8] sm:$0xff]
  %v1811 = vld [vmem:[%s1 + $0xf0] sm:$0xff]
  %v1812 = vld [vmem:[%s1 + $0xf8] sm:$0xff]
  %v1813 = vld [vmem:[%s1 + $0x100] sm:$0xff]
  %v1814 = vld [vmem:[%s1 + $0x108] sm:$0xff]
  %v1815 = vld [vmem:[%s1 + $0x110] sm:$0xff]
  %v1816 = vld [vmem:[%s1 + $0x118] sm:$0xff]
  %v1817 = vld [vmem:[%s1 + $0x120] sm:$0xff]
  %v1818 = vld [vmem:[%s1 + $0x128] sm:$0xff]
  %v1819 = vld [vmem:[%s1 + $0x130] sm:$0xff]
  %v1820 = vld [vmem:[%s1 + $0x138] sm:$0xff]
  %v1821 = vld [vmem:[%s1 + $0x140] sm:$0xff]
  %v1822 = vld [vmem:[%s1 + $0x148] sm:$0xff]
  %v1823 = vld [vmem:[%s1 + $0x150] sm:$0xff]
  %v1824 = vld [vmem:[%s1 + $0x158] sm:$0xff]
  %v1825 = vld [vmem:[%s1 + $0x160] sm:$0xff]
  %v1826 = vld [vmem:[%s1 + $0x168] sm:$0xff]
  %v1827 = vld [vmem:[%s1 + $0x170] sm:$0xff]
  %v1828 = vld [vmem:[%s1 + $0x178] sm:$0xff]
  %v1829 = vld [vmem:[%s1 + $0x180] sm:$0xff]
  %v1830 = vld [vmem:[%s1 + $0x188] sm:$0xff]
  %v1831 = vld [vmem:[%s1 + $0x190] sm:$0xff]
  %v1832 = vld [vmem:[%s1 + $0x198] sm:$0xff]
  %v1833 = vld [vmem:[%s1 + $0x1a0] sm:$0xff]
  %v1834 = vld [vmem:[%s1 + $0x1a8] sm:$0xff]
  %v1835 = vld [vmem:[%s1 + $0x1b0] sm:$0xff]
  %v1836 = vld [vmem:[%s1 + $0x1b8] sm:$0xff]
  %v1837 = vld [vmem:[%s1 + $0x1c0] sm:$0xff]
  %v1838 = vld [vmem:[%s1 + $0x1c8] sm:$0xff]
  %v1839 = vld [vmem:[%s1 + $0x1d0] sm:$0xff]
  %v1840 = vld [vmem:[%s1 + $0x1d8] sm:$0xff]
  %v1841 = vld [vmem:[%s1 + $0x1e0] sm:$0xff]
  %v1842 = vld [vmem:[%s1 + $0x1e8] sm:$0xff]
  %v1843 = vld [vmem:[%s1 + $0x1f0] sm:$0xff]
  %v1844 = vld [vmem:[%s1 + $0x1f8] sm:$0xff]
  %v1845 = vld [vmem:[%s2] sm:$0xff]
  %v1846 = vld [vmem:[%s2 + $0x8] sm:$0xff]
  %v1847 = vld [vmem:[%s2 + $0x10] sm:$0xff]
  %v1848 = vld [vmem:[%s2 + $0x18] sm:$0xff]
  %v1849 = vld [vmem:[%s2 + $0x20] sm:$0xff]
  %v1850 = vld [vmem:[%s2 + $0x28] sm:$0xff]
  %v1851 = vld [vmem:[%s2 + $0x30] sm:$0xff]
  %v1852 = vld [vmem:[%s2 + $0x38] sm:$0xff]
  %v1853 = vld [vmem:[%s2 + $0x40] sm:$0xff]
  %v1854 = vld [vmem:[%s2 + $0x48] sm:$0xff]
  %v1855 = vld [vmem:[%s2 + $0x50] sm:$0xff]
  %v1856 = vld [vmem:[%s2 + $0x58] sm:$0xff]
  %v1857 = vld [vmem:[%s2 + $0x60] sm:$0xff]
  %v1858 = vld [vmem:[%s2 + $0x68] sm:$0xff]
  %v1859 = vld [vmem:[%s2 + $0x70] sm:$0xff]
  %v1860 = vld [vmem:[%s2 + $0x78] sm:$0xff]
  %v1861 = vld [vmem:[%s2 + $0x80] sm:$0xff]
  %v1862 = vld [vmem:[%s2 + $0x88] sm:$0xff]
  %v1863 = vld [vmem:[%s2 + $0x90] sm:$0xff]
  %v1864 = vld [vmem:[%s2 + $0x98] sm:$0xff]
  %v1865 = vld [vmem:[%s2 + $0xa0] sm:$0xff]
  %v1866 = vld [vmem:[%s2 + $0xa8] sm:$0xff]
  %v1867 = vld [vmem:[%s2 + $0xb0] sm:$0xff]
  %v1868 = vld [vmem:[%s2 + $0xb8] sm:$0xff]
  %v1869 = vld [vmem:[%s2 + $0xc0] sm:$0xff]
  %v1870 = vld [vmem:[%s2 + $0xc8] sm:$0xff]
  %v1871 = vld [vmem:[%s2 + $0xd0] sm:$0xff]
  %v1872 = vld [vmem:[%s2 + $0xd8] sm:$0xff]
  %v1873 = vld [vmem:[%s2 + $0xe0] sm:$0xff]
  %v1874 = vld [vmem:[%s2 + $0xe8] sm:$0xff]
  %v1875 = vld [vmem:[%s2 + $0xf0] sm:$0xff]
  %v1876 = vld [vmem:[%s2 + $0xf8] sm:$0xff]
  %v1877 = vld [vmem:[%s2 + $0x100] sm:$0xff]
  %v1878 = vld [vmem:[%s2 + $0x108] sm:$0xff]
  %v1879 = vld [vmem:[%s2 + $0x110] sm:$0xff]
  %v1880 = vld [vmem:[%s2 + $0x118] sm:$0xff]
  %v1881 = vld [vmem:[%s2 + $0x120] sm:$0xff]
  %v1882 = vld [vmem:[%s2 + $0x128] sm:$0xff]
  %v1883 = vld [vmem:[%s2 + $0x130] sm:$0xff]
  %v1884 = vld [vmem:[%s2 + $0x138] sm:$0xff]
  %v1885 = vld [vmem:[%s2 + $0x140] sm:$0xff]
  %v1886 = vld [vmem:[%s2 + $0x148] sm:$0xff]
  %v1887 = vld [vmem:[%s2 + $0x150] sm:$0xff]
  %v1888 = vld [vmem:[%s2 + $0x158] sm:$0xff]
  %v1889 = vld [vmem:[%s2 + $0x160] sm:$0xff]
  %v1890 = vld [vmem:[%s2 + $0x168] sm:$0xff]
  %v1891 = vld [vmem:[%s2 + $0x170] sm:$0xff]
  %v1892 = vld [vmem:[%s2 + $0x178] sm:$0xff]
  %v1893 = vld [vmem:[%s2 + $0x180] sm:$0xff]
  %v1894 = vld [vmem:[%s2 + $0x188] sm:$0xff]
  %v1895 = vld [vmem:[%s2 + $0x190] sm:$0xff]
  %v1896 = vld [vmem:[%s2 + $0x198] sm:$0xff]
  %v1897 = vld [vmem:[%s2 + $0x1a0] sm:$0xff]
  %v1898 = vld [vmem:[%s2 + $0x1a8] sm:$0xff]
  %v1899 = vld [vmem:[%s2 + $0x1b0] sm:$0xff]
  %v1900 = vld [vmem:[%s2 + $0x1b8] sm:$0xff]
  %v1901 = vld [vmem:[%s2 + $0x1c0] sm:$0xff]
  %v1902 = vld [vmem:[%s2 + $0x1c8] sm:$0xff]
  %v1903 = vld [vmem:[%s2 + $0x1d0] sm:$0xff]
  %v1904 = vld [vmem:[%s2 + $0x1d8] sm:$0xff]
  %v1905 = vld [vmem:[%s2 + $0x1e0] sm:$0xff]
  %v1906 = vld [vmem:[%s2 + $0x1e8] sm:$0xff]
  %v1907 = vld [vmem:[%s2 + $0x1f0] sm:$0xff]
  %v1908 = vld [vmem:[%s2 + $0x1f8] sm:$0xff]
  %1973 = vrot.lane.b32.xlu0 %v1781, 32
  %v1974 = vpop.permute.xlu0 %1973
  %1975 = vrot.lane.b32.xlu0 %v1782, 32
  %v1976 = vpop.permute.xlu0 %1975
  %1977 = vrot.lane.b32.xlu0 %v1783, 32
  %v1978 = vpop.permute.xlu0 %1977
  %1979 = vrot.lane.b32.xlu0 %v1784, 32
  %v1980 = vpop.permute.xlu0 %1979
  %1981 = vrot.lane.b32.xlu0 %v1785, 32
  %v1982 = vpop.permute.xlu0 %1981
  %1983 = vrot.lane.b32.xlu0 %v1786, 32
  %v1984 = vpop.permute.xlu0 %1983
  %1985 = vrot.lane.b32.xlu0 %v1787, 32
  %v1986 = vpop.permute.xlu0 %1985
  %1987 = vrot.lane.b32.xlu0 %v1788, 32
  %v1988 = vpop.permute.xlu0 %1987
  %1989 = vrot.lane.b32.xlu0 %v1789, 32
  %v1990 = vpop.permute.xlu0 %1989
  %1991 = vrot.lane.b32.xlu0 %v1790, 32
  %v1992 = vpop.permute.xlu0 %1991
  %1993 = vrot.lane.b32.xlu0 %v1791, 32
  %v1994 = vpop.permute.xlu0 %1993
  %1995 = vrot.lane.b32.xlu0 %v1792, 32
  %v1996 = vpop.permute.xlu0 %1995
  %1997 = vrot.lane.b32.xlu0 %v1793, 32
  %v1998 = vpop.permute.xlu0 %1997
  %1999 = vrot.lane.b32.xlu0 %v1794, 32
  %v2000 = vpop.permute.xlu0 %1999
  %2001 = vrot.lane.b32.xlu0 %v1795, 32
  %v2002 = vpop.permute.xlu0 %2001
  %2003 = vrot.lane.b32.xlu0 %v1796, 32
  %v2004 = vpop.permute.xlu0 %2003
  %2005 = vrot.lane.b32.xlu0 %v1797, 32
  %v2006 = vpop.permute.xlu0 %2005
  %2007 = vrot.lane.b32.xlu0 %v1798, 32
  %v2008 = vpop.permute.xlu0 %2007
  %2009 = vrot.lane.b32.xlu0 %v1799, 32
  %v2010 = vpop.permute.xlu0 %2009
  %2011 = vrot.lane.b32.xlu0 %v1800, 32
  %v2012 = vpop.permute.xlu0 %2011
  %2013 = vrot.lane.b32.xlu0 %v1801, 32
  %v2014 = vpop.permute.xlu0 %2013
  %2015 = vrot.lane.b32.xlu0 %v1802, 32
  %v2016 = vpop.permute.xlu0 %2015
  %2017 = vrot.lane.b32.xlu0 %v1803, 32
  %v2018 = vpop.permute.xlu0 %2017
  %2019 = vrot.lane.b32.xlu0 %v1804, 32
  %v2020 = vpop.permute.xlu0 %2019
  %2021 = vrot.lane.b32.xlu0 %v1805, 32
  %v2022 = vpop.permute.xlu0 %2021
  %2023 = vrot.lane.b32.xlu0 %v1806, 32
  %v2024 = vpop.permute.xlu0 %2023
  %2025 = vrot.lane.b32.xlu0 %v1807, 32
  %v2026 = vpop.permute.xlu0 %2025
  %2027 = vrot.lane.b32.xlu0 %v1808, 32
  %v2028 = vpop.permute.xlu0 %2027
  %2029 = vrot.lane.b32.xlu0 %v1809, 32
  %v2030 = vpop.permute.xlu0 %2029
  %2031 = vrot.lane.b32.xlu0 %v1810, 32
  %v2032 = vpop.permute.xlu0 %2031
  %2033 = vrot.lane.b32.xlu0 %v1811, 32
  %v2034 = vpop.permute.xlu0 %2033
  %2035 = vrot.lane.b32.xlu0 %v1812, 32
  %v2036 = vpop.permute.xlu0 %2035
  %2037 = vrot.lane.b32.xlu0 %v1813, 32
  %v2038 = vpop.permute.xlu0 %2037
  %2039 = vrot.lane.b32.xlu0 %v1814, 32
  %v2040 = vpop.permute.xlu0 %2039
  %2041 = vrot.lane.b32.xlu0 %v1815, 32
  %v2042 = vpop.permute.xlu0 %2041
  %2043 = vrot.lane.b32.xlu0 %v1816, 32
  %v2044 = vpop.permute.xlu0 %2043
  %2045 = vrot.lane.b32.xlu0 %v1817, 32
  %v2046 = vpop.permute.xlu0 %2045
  %2047 = vrot.lane.b32.xlu0 %v1818, 32
  %v2048 = vpop.permute.xlu0 %2047
  %2049 = vrot.lane.b32.xlu0 %v1819, 32
  %v2050 = vpop.permute.xlu0 %2049
  %2051 = vrot.lane.b32.xlu0 %v1820, 32
  %v2052 = vpop.permute.xlu0 %2051
  %2053 = vrot.lane.b32.xlu0 %v1821, 32
  %v2054 = vpop.permute.xlu0 %2053
  %2055 = vrot.lane.b32.xlu0 %v1822, 32
  %v2056 = vpop.permute.xlu0 %2055
  %2057 = vrot.lane.b32.xlu0 %v1823, 32
  %v2058 = vpop.permute.xlu0 %2057
  %2059 = vrot.lane.b32.xlu0 %v1824, 32
  %v2060 = vpop.permute.xlu0 %2059
  %2061 = vrot.lane.b32.xlu0 %v1825, 32
  %v2062 = vpop.permute.xlu0 %2061
  %2063 = vrot.lane.b32.xlu0 %v1826, 32
  %v2064 = vpop.permute.xlu0 %2063
  %2065 = vrot.lane.b32.xlu0 %v1827, 32
  %v2066 = vpop.permute.xlu0 %2065
  %2067 = vrot.lane.b32.xlu0 %v1828, 32
  %v2068 = vpop.permute.xlu0 %2067
  %2069 = vrot.lane.b32.xlu0 %v1829, 32
  %v2070 = vpop.permute.xlu0 %2069
  %2071 = vrot.lane.b32.xlu0 %v1830, 32
  %v2072 = vpop.permute.xlu0 %2071
  %2073 = vrot.lane.b32.xlu0 %v1831, 32
  %v2074 = vpop.permute.xlu0 %2073
  %2075 = vrot.lane.b32.xlu0 %v1832, 32
  %v2076 = vpop.permute.xlu0 %2075
  %2077 = vrot.lane.b32.xlu0 %v1833, 32
  %v2078 = vpop.permute.xlu0 %2077
  %2079 = vrot.lane.b32.xlu0 %v1834, 32
  %v2080 = vpop.permute.xlu0 %2079
  %2081 = vrot.lane.b32.xlu0 %v1835, 32
  %v2082 = vpop.permute.xlu0 %2081
  %2083 = vrot.lane.b32.xlu0 %v1836, 32
  %v2084 = vpop.permute.xlu0 %2083
  %2085 = vrot.lane.b32.xlu0 %v1837, 32
  %v2086 = vpop.permute.xlu0 %2085
  %2087 = vrot.lane.b32.xlu0 %v1838, 32
  %v2088 = vpop.permute.xlu0 %2087
  %2089 = vrot.lane.b32.xlu0 %v1839, 32
  %v2090 = vpop.permute.xlu0 %2089
  %2091 = vrot.lane.b32.xlu0 %v1840, 32
  %v2092 = vpop.permute.xlu0 %2091
  %2093 = vrot.lane.b32.xlu0 %v1841, 32
  %v2094 = vpop.permute.xlu0 %2093
  %2095 = vrot.lane.b32.xlu0 %v1842, 32
  %v2096 = vpop.permute.xlu0 %2095
  %2097 = vrot.lane.b32.xlu0 %v1843, 32
  %v2098 = vpop.permute.xlu0 %2097
  %2099 = vrot.lane.b32.xlu0 %v1844, 32
  %v2100 = vpop.permute.xlu0 %2099
  %2229 = vrot.lane.b32.xlu0 %v1845, 64
  %v2230 = vpop.permute.xlu0 %2229
  %2231 = vrot.lane.b32.xlu0 %v1846, 64
  %v2232 = vpop.permute.xlu0 %2231
  %2233 = vrot.lane.b32.xlu0 %v1847, 64
  %v2234 = vpop.permute.xlu0 %2233
  %2235 = vrot.lane.b32.xlu0 %v1848, 64
  %v2236 = vpop.permute.xlu0 %2235
  %2237 = vrot.lane.b32.xlu0 %v1849, 64
  %v2238 = vpop.permute.xlu0 %2237
  %2239 = vrot.lane.b32.xlu0 %v1850, 64
  %v2240 = vpop.permute.xlu0 %2239
  %2241 = vrot.lane.b32.xlu0 %v1851, 64
  %v2242 = vpop.permute.xlu0 %2241
  %2243 = vrot.lane.b32.xlu0 %v1852, 64
  %v2244 = vpop.permute.xlu0 %2243
  %2245 = vrot.lane.b32.xlu0 %v1853, 64
  %v2246 = vpop.permute.xlu0 %2245
  %2247 = vrot.lane.b32.xlu0 %v1854, 64
  %v2248 = vpop.permute.xlu0 %2247
  %2249 = vrot.lane.b32.xlu0 %v1855, 64
  %v2250 = vpop.permute.xlu0 %2249
  %2251 = vrot.lane.b32.xlu0 %v1856, 64
  %v2252 = vpop.permute.xlu0 %2251
  %2253 = vrot.lane.b32.xlu0 %v1857, 64
  %v2254 = vpop.permute.xlu0 %2253
  %2255 = vrot.lane.b32.xlu0 %v1858, 64
  %v2256 = vpop.permute.xlu0 %2255
  %2257 = vrot.lane.b32.xlu0 %v1859, 64
  %v2258 = vpop.permute.xlu0 %2257
  %2259 = vrot.lane.b32.xlu0 %v1860, 64
  %v2260 = vpop.permute.xlu0 %2259
  %2261 = vrot.lane.b32.xlu0 %v1861, 64
  %v2262 = vpop.permute.xlu0 %2261
  %2263 = vrot.lane.b32.xlu0 %v1862, 64
  %v2264 = vpop.permute.xlu0 %2263
  %2265 = vrot.lane.b32.xlu0 %v1863, 64
  %v2266 = vpop.permute.xlu0 %2265
  %2267 = vrot.lane.b32.xlu0 %v1864, 64
  %v2268 = vpop.permute.xlu0 %2267
  %2269 = vrot.lane.b32.xlu0 %v1865, 64
  %v2270 = vpop.permute.xlu0 %2269
  %2271 = vrot.lane.b32.xlu0 %v1866, 64
  %v2272 = vpop.permute.xlu0 %2271
  %2273 = vrot.lane.b32.xlu0 %v1867, 64
  %v2274 = vpop.permute.xlu0 %2273
  %2275 = vrot.lane.b32.xlu0 %v1868, 64
  %v2276 = vpop.permute.xlu0 %2275
  %2277 = vrot.lane.b32.xlu0 %v1869, 64
  %v2278 = vpop.permute.xlu0 %2277
  %2279 = vrot.lane.b32.xlu0 %v1870, 64
  %v2280 = vpop.permute.xlu0 %2279
  %2281 = vrot.lane.b32.xlu0 %v1871, 64
  %v2282 = vpop.permute.xlu0 %2281
  %2283 = vrot.lane.b32.xlu0 %v1872, 64
  %v2284 = vpop.permute.xlu0 %2283
  %2285 = vrot.lane.b32.xlu0 %v1873, 64
  %v2286 = vpop.permute.xlu0 %2285
  %2287 = vrot.lane.b32.xlu0 %v1874, 64
  %v2288 = vpop.permute.xlu0 %2287
  %2289 = vrot.lane.b32.xlu0 %v1875, 64
  %v2290 = vpop.permute.xlu0 %2289
  %2291 = vrot.lane.b32.xlu0 %v1876, 64
  %v2292 = vpop.permute.xlu0 %2291
  %2293 = vrot.lane.b32.xlu0 %v1877, 64
  %v2294 = vpop.permute.xlu0 %2293
  %2295 = vrot.lane.b32.xlu0 %v1878, 64
  %v2296 = vpop.permute.xlu0 %2295
  %2297 = vrot.lane.b32.xlu0 %v1879, 64
  %v2298 = vpop.permute.xlu0 %2297
  %2299 = vrot.lane.b32.xlu0 %v1880, 64
  %v2300 = vpop.permute.xlu0 %2299
  %2301 = vrot.lane.b32.xlu0 %v1881, 64
  %v2302 = vpop.permute.xlu0 %2301
  %2303 = vrot.lane.b32.xlu0 %v1882, 64
  %v2304 = vpop.permute.xlu0 %2303
  %2305 = vrot.lane.b32.xlu0 %v1883, 64
  %v2306 = vpop.permute.xlu0 %2305
  %2307 = vrot.lane.b32.xlu0 %v1884, 64
  %v2308 = vpop.permute.xlu0 %2307
  %2309 = vrot.lane.b32.xlu0 %v1885, 64
  %v2310 = vpop.permute.xlu0 %2309
  %2311 = vrot.lane.b32.xlu0 %v1886, 64
  %v2312 = vpop.permute.xlu0 %2311
  %2313 = vrot.lane.b32.xlu0 %v1887, 64
  %v2314 = vpop.permute.xlu0 %2313
  %2315 = vrot.lane.b32.xlu0 %v1888, 64
  %v2316 = vpop.permute.xlu0 %2315
  %2317 = vrot.lane.b32.xlu0 %v1889, 64
  %v2318 = vpop.permute.xlu0 %2317
  %2319 = vrot.lane.b32.xlu0 %v1890, 64
  %v2320 = vpop.permute.xlu0 %2319
  %2321 = vrot.lane.b32.xlu0 %v1891, 64
  %v2322 = vpop.permute.xlu0 %2321
  %2323 = vrot.lane.b32.xlu0 %v1892, 64
  %v2324 = vpop.permute.xlu0 %2323
  %2325 = vrot.lane.b32.xlu0 %v1893, 64
  %v2326 = vpop.permute.xlu0 %2325
  %2327 = vrot.lane.b32.xlu0 %v1894, 64
  %v2328 = vpop.permute.xlu0 %2327
  %2329 = vrot.lane.b32.xlu0 %v1895, 64
  %v2330 = vpop.permute.xlu0 %2329
  %2331 = vrot.lane.b32.xlu0 %v1896, 64
  %v2332 = vpop.permute.xlu0 %2331
  %2333 = vrot.lane.b32.xlu0 %v1897, 64
  %v2334 = vpop.permute.xlu0 %2333
  %2335 = vrot.lane.b32.xlu0 %v1898, 64
  %v2336 = vpop.permute.xlu0 %2335
  %2337 = vrot.lane.b32.xlu0 %v1899, 64
  %v2338 = vpop.permute.xlu0 %2337
  %2339 = vrot.lane.b32.xlu0 %v1900, 64
  %v2340 = vpop.permute.xlu0 %2339
  %2341 = vrot.lane.b32.xlu0 %v1901, 64
  %v2342 = vpop.permute.xlu0 %2341
  %2343 = vrot.lane.b32.xlu0 %v1902, 64
  %v2344 = vpop.permute.xlu0 %2343
  %2345 = vrot.lane.b32.xlu0 %v1903, 64
  %v2346 = vpop.permute.xlu0 %2345
  %2347 = vrot.lane.b32.xlu0 %v1904, 64
  %v2348 = vpop.permute.xlu0 %2347
  %2349 = vrot.lane.b32.xlu0 %v1905, 64
  %v2350 = vpop.permute.xlu0 %2349
  %2351 = vrot.lane.b32.xlu0 %v1906, 64
  %v2352 = vpop.permute.xlu0 %2351
  %2353 = vrot.lane.b32.xlu0 %v1907, 64
  %v2354 = vpop.permute.xlu0 %2353
  %2355 = vrot.lane.b32.xlu0 %v1908, 64
  %v2356 = vpop.permute.xlu0 %2355
  %vm2421 = vcmask 261120
  %v2422 = vsel %vm2421, %v1717, %v1974
  %v2423 = vsel %vm2421, %v1718, %v1976
  %v2424 = vsel %vm2421, %v1719, %v1978
  %v2425 = vsel %vm2421, %v1720, %v1980
  %v2426 = vsel %vm2421, %v1721, %v1982
  %v2427 = vsel %vm2421, %v1722, %v1984
  %v2428 = vsel %vm2421, %v1723, %v1986
  %v2429 = vsel %vm2421, %v1724, %v1988
  %v2430 = vsel %vm2421, %v1725, %v1990
  %v2431 = vsel %vm2421, %v1726, %v1992
  %v2432 = vsel %vm2421, %v1727, %v1994
  %v2433 = vsel %vm2421, %v1728, %v1996
  %v2434 = vsel %vm2421, %v1729, %v1998
  %v2435 = vsel %vm2421, %v1730, %v2000
  %v2436 = vsel %vm2421, %v1731, %v2002
  %v2437 = vsel %vm2421, %v1732, %v2004
  %v2438 = vsel %vm2421, %v1733, %v2006
  %v2439 = vsel %vm2421, %v1734, %v2008
  %v2440 = vsel %vm2421, %v1735, %v2010
  %v2441 = vsel %vm2421, %v1736, %v2012
  %v2442 = vsel %vm2421, %v1737, %v2014
  %v2443 = vsel %vm2421, %v1738, %v2016
  %v2444 = vsel %vm2421, %v1739, %v2018
  %v2445 = vsel %vm2421, %v1740, %v2020
  %v2446 = vsel %vm2421, %v1741, %v2022
  %v2447 = vsel %vm2421, %v1742, %v2024
  %v2448 = vsel %vm2421, %v1743, %v2026
  %v2449 = vsel %vm2421, %v1744, %v2028
  %v2450 = vsel %vm2421, %v1745, %v2030
  %v2451 = vsel %vm2421, %v1746, %v2032
  %v2452 = vsel %vm2421, %v1747, %v2034
  %v2453 = vsel %vm2421, %v1748, %v2036
  %v2454 = vsel %vm2421, %v1749, %v2038
  %v2455 = vsel %vm2421, %v1750, %v2040
  %v2456 = vsel %vm2421, %v1751, %v2042
  %v2457 = vsel %vm2421, %v1752, %v2044
  %v2458 = vsel %vm2421, %v1753, %v2046
  %v2459 = vsel %vm2421, %v1754, %v2048
  %v2460 = vsel %vm2421, %v1755, %v2050
  %v2461 = vsel %vm2421, %v1756, %v2052
  %v2462 = vsel %vm2421, %v1757, %v2054
  %v2463 = vsel %vm2421, %v1758, %v2056
  %v2464 = vsel %vm2421, %v1759, %v2058
  %v2465 = vsel %vm2421, %v1760, %v2060
  %v2466 = vsel %vm2421, %v1761, %v2062
  %v2467 = vsel %vm2421, %v1762, %v2064
  %v2468 = vsel %vm2421, %v1763, %v2066
  %v2469 = vsel %vm2421, %v1764, %v2068
  %v2470 = vsel %vm2421, %v1765, %v2070
  %v2471 = vsel %vm2421, %v1766, %v2072
  %v2472 = vsel %vm2421, %v1767, %v2074
  %v2473 = vsel %vm2421, %v1768, %v2076
  %v2474 = vsel %vm2421, %v1769, %v2078
  %v2475 = vsel %vm2421, %v1770, %v2080
  %v2476 = vsel %vm2421, %v1771, %v2082
  %v2477 = vsel %vm2421, %v1772, %v2084
  %v2478 = vsel %vm2421, %v1773, %v2086
  %v2479 = vsel %vm2421, %v1774, %v2088
  %v2480 = vsel %vm2421, %v1775, %v2090
  %v2481 = vsel %vm2421, %v1776, %v2092
  %v2482 = vsel %vm2421, %v1777, %v2094
  %v2483 = vsel %vm2421, %v1778, %v2096
  %v2484 = vsel %vm2421, %v1779, %v2098
  %v2485 = vsel %vm2421, %v1780, %v2100
  %vm2486 = vcmask 523264
  %v2487 = vsel %vm2486, %v2422, %v2230
  %v2488 = vsel %vm2486, %v2423, %v2232
  %v2489 = vsel %vm2486, %v2424, %v2234
  %v2490 = vsel %vm2486, %v2425, %v2236
  %v2491 = vsel %vm2486, %v2426, %v2238
  %v2492 = vsel %vm2486, %v2427, %v2240
  %v2493 = vsel %vm2486, %v2428, %v2242
  %v2494 = vsel %vm2486, %v2429, %v2244
  %v2495 = vsel %vm2486, %v2430, %v2246
  %v2496 = vsel %vm2486, %v2431, %v2248
  %v2497 = vsel %vm2486, %v2432, %v2250
  %v2498 = vsel %vm2486, %v2433, %v2252
  %v2499 = vsel %vm2486, %v2434, %v2254
  %v2500 = vsel %vm2486, %v2435, %v2256
  %v2501 = vsel %vm2486, %v2436, %v2258
  %v2502 = vsel %vm2486, %v2437, %v2260
  %v2503 = vsel %vm2486, %v2438, %v2262
  %v2504 = vsel %vm2486, %v2439, %v2264
  %v2505 = vsel %vm2486, %v2440, %v2266
  %v2506 = vsel %vm2486, %v2441, %v2268
  %v2507 = vsel %vm2486, %v2442, %v2270
  %v2508 = vsel %vm2486, %v2443, %v2272
  %v2509 = vsel %vm2486, %v2444, %v2274
  %v2510 = vsel %vm2486, %v2445, %v2276
  %v2511 = vsel %vm2486, %v2446, %v2278
  %v2512 = vsel %vm2486, %v2447, %v2280
  %v2513 = vsel %vm2486, %v2448, %v2282
  %v2514 = vsel %vm2486, %v2449, %v2284
  %v2515 = vsel %vm2486, %v2450, %v2286
  %v2516 = vsel %vm2486, %v2451, %v2288
  %v2517 = vsel %vm2486, %v2452, %v2290
  %v2518 = vsel %vm2486, %v2453, %v2292
  %v2519 = vsel %vm2486, %v2454, %v2294
  %v2520 = vsel %vm2486, %v2455, %v2296
  %v2521 = vsel %vm2486, %v2456, %v2298
  %v2522 = vsel %vm2486, %v2457, %v2300
  %v2523 = vsel %vm2486, %v2458, %v2302
  %v2524 = vsel %vm2486, %v2459, %v2304
  %v2525 = vsel %vm2486, %v2460, %v2306
  %v2526 = vsel %vm2486, %v2461, %v2308
  %v2527 = vsel %vm2486, %v2462, %v2310
  %v2528 = vsel %vm2486, %v2463, %v2312
  %v2529 = vsel %vm2486, %v2464, %v2314
  %v2530 = vsel %vm2486, %v2465, %v2316
  %v2531 = vsel %vm2486, %v2466, %v2318
  %v2532 = vsel %vm2486, %v2467, %v2320
  %v2533 = vsel %vm2486, %v2468, %v2322
  %v2534 = vsel %vm2486, %v2469, %v2324
  %v2535 = vsel %vm2486, %v2470, %v2326
  %v2536 = vsel %vm2486, %v2471, %v2328
  %v2537 = vsel %vm2486, %v2472, %v2330
  %v2538 = vsel %vm2486, %v2473, %v2332
  %v2539 = vsel %vm2486, %v2474, %v2334
  %v2540 = vsel %vm2486, %v2475, %v2336
  %v2541 = vsel %vm2486, %v2476, %v2338
  %v2542 = vsel %vm2486, %v2477, %v2340
  %v2543 = vsel %vm2486, %v2478, %v2342
  %v2544 = vsel %vm2486, %v2479, %v2344
  %v2545 = vsel %vm2486, %v2480, %v2346
  %v2546 = vsel %vm2486, %v2481, %v2348
  %v2547 = vsel %vm2486, %v2482, %v2350
  %v2548 = vsel %vm2486, %v2483, %v2352
  %v2549 = vsel %vm2486, %v2484, %v2354
  %v2550 = vsel %vm2486, %v2485, %v2356
  %v2551 = vld [vmem:[%s5] sm:$0xff]
  %v2552 = vld [vmem:[%s5 + $0x8] sm:$0xff]
  %v2553 = vld [vmem:[%s5 + $0x10] sm:$0xff]
  %v2554 = vld [vmem:[%s5 + $0x18] sm:$0xff]
  %v2555 = vld [vmem:[%s5 + $0x20] sm:$0xff]
  %v2556 = vld [vmem:[%s5 + $0x28] sm:$0xff]
  %v2557 = vld [vmem:[%s5 + $0x30] sm:$0xff]
  %v2558 = vld [vmem:[%s5 + $0x38] sm:$0xff]
  %v2559 = vld [vmem:[%s5 + $0x40] sm:$0xff]
  %v2560 = vld [vmem:[%s5 + $0x48] sm:$0xff]
  %v2561 = vld [vmem:[%s5 + $0x50] sm:$0xff]
  %v2562 = vld [vmem:[%s5 + $0x58] sm:$0xff]
  %v2563 = vld [vmem:[%s6] sm:$0x1]
  %v2565 = vlaneseq
  %v2566 = vshrl.u32 %v2565, 7
  %v2567 = vsub.s32 0, %v2566
  %v2568 = vrot.slane %v2563, %v2567
  %vm2570 = vcmask 785408
  %v2572 = vsel %vm2570, %v2487, 0
  %v2575 = vsel %vm2570, %v2488, 0
  %v2578 = vsel %vm2570, %v2489, 0
  %v2581 = vsel %vm2570, %v2490, 0
  %v2584 = vsel %vm2570, %v2491, 0
  %v2587 = vsel %vm2570, %v2492, 0
  %v2590 = vsel %vm2570, %v2493, 0
  %v2593 = vsel %vm2570, %v2494, 0
  %v2596 = vsel %vm2570, %v2495, 0
  %v2599 = vsel %vm2570, %v2496, 0
  %v2602 = vsel %vm2570, %v2497, 0
  %v2605 = vsel %vm2570, %v2498, 0
  %v2608 = vsel %vm2570, %v2499, 0
  %v2611 = vsel %vm2570, %v2500, 0
  %v2614 = vsel %vm2570, %v2501, 0
  %v2617 = vsel %vm2570, %v2502, 0
  %v2620 = vsel %vm2570, %v2503, 0
  %v2623 = vsel %vm2570, %v2504, 0
  %v2626 = vsel %vm2570, %v2505, 0
  %v2629 = vsel %vm2570, %v2506, 0
  %v2632 = vsel %vm2570, %v2507, 0
  %v2635 = vsel %vm2570, %v2508, 0
  %v2638 = vsel %vm2570, %v2509, 0
  %v2641 = vsel %vm2570, %v2510, 0
  %v2644 = vsel %vm2570, %v2511, 0
  %v2647 = vsel %vm2570, %v2512, 0
  %v2650 = vsel %vm2570, %v2513, 0
  %v2653 = vsel %vm2570, %v2514, 0
  %v2656 = vsel %vm2570, %v2515, 0
  %v2659 = vsel %vm2570, %v2516, 0
  %v2662 = vsel %vm2570, %v2517, 0
  %v2665 = vsel %vm2570, %v2518, 0
  %v2668 = vsel %vm2570, %v2519, 0
  %v2671 = vsel %vm2570, %v2520, 0
  %v2674 = vsel %vm2570, %v2521, 0
  %v2677 = vsel %vm2570, %v2522, 0
  %v2680 = vsel %vm2570, %v2523, 0
  %v2683 = vsel %vm2570, %v2524, 0
  %v2686 = vsel %vm2570, %v2525, 0
  %v2689 = vsel %vm2570, %v2526, 0
  %v2692 = vsel %vm2570, %v2527, 0
  %v2695 = vsel %vm2570, %v2528, 0
  %v2698 = vsel %vm2570, %v2529, 0
  %v2701 = vsel %vm2570, %v2530, 0
  %v2704 = vsel %vm2570, %v2531, 0
  %v2707 = vsel %vm2570, %v2532, 0
  %v2710 = vsel %vm2570, %v2533, 0
  %v2713 = vsel %vm2570, %v2534, 0
  %v2716 = vsel %vm2570, %v2535, 0
  %v2719 = vsel %vm2570, %v2536, 0
  %v2722 = vsel %vm2570, %v2537, 0
  %v2725 = vsel %vm2570, %v2538, 0
  %v2728 = vsel %vm2570, %v2539, 0
  %v2731 = vsel %vm2570, %v2540, 0
  %v2734 = vsel %vm2570, %v2541, 0
  %v2737 = vsel %vm2570, %v2542, 0
  %v2740 = vsel %vm2570, %v2543, 0
  %v2743 = vsel %vm2570, %v2544, 0
  %v2746 = vsel %vm2570, %v2545, 0
  %v2749 = vsel %vm2570, %v2546, 0
  %v2752 = vsel %vm2570, %v2547, 0
  %v2755 = vsel %vm2570, %v2548, 0
  %v2758 = vsel %vm2570, %v2549, 0
  %v2761 = vsel %vm2570, %v2550, 0
  %2763 = vmatprep.subr.mxu0 0.0
  %2764 = vmatpush1.msra.mxu0 %v2551
  %2765 = vmatprep.subr.mxu0 0.0
  %2766 = vmatpush1.msra.mxu0 %v2552
  %2767 = vmatprep.subr.mxu0 0.0
  %2768 = vmatpush1.msra.mxu0 %v2553
  %2769 = vmatprep.subr.mxu0 0.0
  %2770 = vmatpush1.msra.mxu0 %v2554
  %2771 = vmatprep.subr.mxu0 0.0
  %2772 = vmatpush1.msra.mxu0 %v2555
  %2773 = vmatprep.subr.mxu0 0.0
  %2774 = vmatpush1.msra.mxu0 %v2556
  %2775 = vmatprep.subr.mxu0 0.0
  %2776 = vmatpush1.msra.mxu0 %v2557
  %2777 = vmatprep.subr.mxu0 0.0
  %2778 = vmatpush1.msra.mxu0 %v2558
  %2779 = vmatprep.subr.mxu0 0.0
  %2780 = vmatpush1.msra.mxu0 %v2559
  %2781 = vmatprep.subr.mxu0 0.0
  %2782 = vmatpush1.msra.mxu0 %v2560
  %2783 = vmatprep.subr.mxu0 0.0
  %2784 = vmatpush1.msra.mxu0 %v2561
  %2785 = vmatprep.subr.mxu0 0.0
  %2786 = vmatpush1.msra.mxu0 %v2562
  %2787 = vmatprep.subr.mxu0 0.0
  %2788 = vmatpush1.msra.mxu0 0.0
  %2789 = vmatprep.subr.mxu0 0.0
  %2790 = vmatpush1.msra.mxu0 0.0
  %2791 = vmatprep.subr.mxu0 0.0
  %2792 = vmatpush1.msra.mxu0 0.0
  %2793 = vmatprep.subr.mxu0 0.0
  %2794 = vmatpush1.msra.mxu0 0.0
  %2795 = vmatprep.subr.mxu0 0.0
  %2796 = vmatpush1.msra.mxu0 0.0
  %2797 = vmatprep.subr.mxu0 0.0
  %2798 = vmatpush1.msra.mxu0 0.0
  %2799 = vmatprep.subr.mxu0 0.0
  %2800 = vmatpush1.msra.mxu0 0.0
  %2801 = vmatprep.subr.mxu0 0.0
  %2802 = vmatpush1.msra.mxu0 0.0
  %2803 = vmatprep.subr.mxu0 0.0
  %2804 = vmatpush1.msra.mxu0 0.0
  %2805 = vmatprep.subr.mxu0 0.0
  %2806 = vmatpush1.msra.mxu0 0.0
  %2807 = vmatprep.subr.mxu0 0.0
  %2808 = vmatpush1.msra.mxu0 0.0
  %2809 = vmatprep.subr.mxu0 0.0
  %2810 = vmatpush1.msra.mxu0 0.0
  %2811 = vmatprep.subr.mxu0 0.0
  %2812 = vmatpush1.msra.mxu0 0.0
  %2813 = vmatprep.subr.mxu0 0.0
  %2814 = vmatpush1.msra.mxu0 0.0
  %2815 = vmatprep.subr.mxu0 0.0
  %2816 = vmatpush1.msra.mxu0 0.0
  %2817 = vmatprep.subr.mxu0 0.0
  %2818 = vmatpush1.msra.mxu0 0.0
  %2819 = vmatprep.subr.mxu0 0.0
  %2820 = vmatpush1.msra.mxu0 0.0
  %2821 = vmatprep.subr.mxu0 0.0
  %2822 = vmatpush1.msra.mxu0 0.0
  %2823 = vmatprep.subr.mxu0 0.0
  %2824 = vmatpush1.msra.mxu0 0.0
  %2825 = vmatprep.subr.mxu0 0.0
  %2826 = vmatpush1.msra.mxu0 0.0
  %2827 = vmatprep.mubr.f32.mxu0 0.0
  %2828 = vmatmul.mubr.f32.gmra.mrb[0].mxu0 %v2572
  %v2829 = vpop.f32.mrb[0].mxu0
  %v2830 = vadd.f32 %v2568, %v2829
  %v2831 = vpop.f32.mrb[0].mxu0
  %2832 = vmatprep.mubr.f32.mxu0 0.0
  %2833 = vmatmul.mubr.f32.gmra.mrb[0].mxu0 %v2575
  %v2834 = vpop.f32.mrb[0].mxu0
  %v2835 = vadd.f32 %v2568, %v2834
  %v2836 = vpop.f32.mrb[0].mxu0
  %2837 = vmatprep.mubr.f32.mxu0 0.0
  %2838 = vmatmul.mubr.f32.gmra.mrb[0].mxu0 %v2578
  %v2839 = vpop.f32.mrb[0].mxu0
  %v2840 = vadd.f32 %v2568, %v2839
  %v2841 = vpop.f32.mrb[0].mxu0
  %2842 = vmatprep.mubr.f32.mxu0 0.0
  %2843 = vmatmul.mubr.f32.gmra.mrb[0].mxu0 %v2581
  %v2844 = vpop.f32.mrb[0].mxu0
  %v2845 = vadd.f32 %v2568, %v2844
  %v2846 = vpop.f32.mrb[0].mxu0
  %2847 = vmatprep.mubr.f32.mxu0 0.0
  %2848 = vmatmul.mubr.f32.gmra.mrb[0].mxu0 %v2584
  %v2849 = vpop.f32.mrb[0].mxu0
  %v2850 = vadd.f32 %v2568, %v2849
  %v2851 = vpop.f32.mrb[0].mxu0
  %2852 = vmatprep.mubr.f32.mxu0 0.0
  %2853 = vmatmul.mubr.f32.gmra.mrb[0].mxu0 %v2587
  %v2854 = vpop.f32.mrb[0].mxu0
  %v2855 = vadd.f32 %v2568, %v2854
  %v2856 = vpop.f32.mrb[0].mxu0
  %2857 = vmatprep.mubr.f32.mxu0 0.0
  %2858 = vmatmul.mubr.f32.gmra.mrb[0].mxu0 %v2590
  %v2859 = vpop.f32.mrb[0].mxu0
  %v2860 = vadd.f32 %v2568, %v2859
  %v2861 = vpop.f32.mrb[0].mxu0
  %2862 = vmatprep.mubr.f32.mxu0 0.0
  %2863 = vmatmul.mubr.f32.gmra.mrb[0].mxu0 %v2593
  %v2864 = vpop.f32.mrb[0].mxu0
  %v2865 = vadd.f32 %v2568, %v2864
  %v2866 = vpop.f32.mrb[0].mxu0
  %2867 = vmatprep.mubr.f32.mxu0 0.0
  %2868 = vmatmul.mubr.f32.gmra.mrb[0].mxu0 %v2596
  %v2869 = vpop.f32.mrb[0].mxu0
  %v2870 = vadd.f32 %v2568, %v2869
  %v2871 = vpop.f32.mrb[0].mxu0
  %2872 = vmatprep.mubr.f32.mxu0 0.0
  %2873 = vmatmul.mubr.f32.gmra.mrb[0].mxu0 %v2599
  %v2874 = vpop.f32.mrb[0].mxu0
  %v2875 = vadd.f32 %v2568, %v2874
  %v2876 = vpop.f32.mrb[0].mxu0
  %2877 = vmatprep.mubr.f32.mxu0 0.0
  %2878 = vmatmul.mubr.f32.gmra.mrb[0].mxu0 %v2602
  %v2879 = vpop.f32.mrb[0].mxu0
  %v2880 = vadd.f32 %v2568, %v2879
  %v2881 = vpop.f32.mrb[0].mxu0
  %2882 = vmatprep.mubr.f32.mxu0 0.0
  %2883 = vmatmul.mubr.f32.gmra.mrb[0].mxu0 %v2605
  %v2884 = vpop.f32.mrb[0].mxu0
  %v2885 = vadd.f32 %v2568, %v2884
  %v2886 = vpop.f32.mrb[0].mxu0
  %2887 = vmatprep.mubr.f32.mxu0 0.0
  %2888 = vmatmul.mubr.f32.gmra.mrb[0].mxu0 %v2608
  %v2889 = vpop.f32.mrb[0].mxu0
  %v2890 = vadd.f32 %v2568, %v2889
  %v2891 = vpop.f32.mrb[0].mxu0
  %2892 = vmatprep.mubr.f32.mxu0 0.0
  %2893 = vmatmul.mubr.f32.gmra.mrb[0].mxu0 %v2611
  %v2894 = vpop.f32.mrb[0].mxu0
  %v2895 = vadd.f32 %v2568, %v2894
  %v2896 = vpop.f32.mrb[0].mxu0
  %2897 = vmatprep.mubr.f32.mxu0 0.0
  %2898 = vmatmul.mubr.f32.gmra.mrb[0].mxu0 %v2614
  %v2899 = vpop.f32.mrb[0].mxu0
  %v2900 = vadd.f32 %v2568, %v2899
  %v2901 = vpop.f32.mrb[0].mxu0
  %2902 = vmatprep.mubr.f32.mxu0 0.0
  %2903 = vmatmul.mubr.f32.gmra.mrb[0].mxu0 %v2617
  %v2904 = vpop.f32.mrb[0].mxu0
  %v2905 = vadd.f32 %v2568, %v2904
  %v2906 = vpop.f32.mrb[0].mxu0
  %2907 = vmatprep.mubr.f32.mxu0 0.0
  %2908 = vmatmul.mubr.f32.gmra.mrb[0].mxu0 %v2620
  %v2909 = vpop.f32.mrb[0].mxu0
  %v2910 = vadd.f32 %v2568, %v2909
  %v2911 = vpop.f32.mrb[0].mxu0
  %2912 = vmatprep.mubr.f32.mxu0 0.0
  %2913 = vmatmul.mubr.f32.gmra.mrb[0].mxu0 %v2623
  %v2914 = vpop.f32.mrb[0].mxu0
  %v2915 = vadd.f32 %v2568, %v2914
  %v2916 = vpop.f32.mrb[0].mxu0
  %2917 = vmatprep.mubr.f32.mxu0 0.0
  %2918 = vmatmul.mubr.f32.gmra.mrb[0].mxu0 %v2626
  %v2919 = vpop.f32.mrb[0].mxu0
  %v2920 = vadd.f32 %v2568, %v2919
  %v2921 = vpop.f32.mrb[0].mxu0
  %2922 = vmatprep.mubr.f32.mxu0 0.0
  %2923 = vmatmul.mubr.f32.gmra.mrb[0].mxu0 %v2629
  %v2924 = vpop.f32.mrb[0].mxu0
  %v2925 = vadd.f32 %v2568, %v2924
  %v2926 = vpop.f32.mrb[0].mxu0
  %2927 = vmatprep.mubr.f32.mxu0 0.0
  %2928 = vmatmul.mubr.f32.gmra.mrb[0].mxu0 %v2632
  %v2929 = vpop.f32.mrb[0].mxu0
  %v2930 = vadd.f32 %v2568, %v2929
  %v2931 = vpop.f32.mrb[0].mxu0
  %2932 = vmatprep.mubr.f32.mxu0 0.0
  %2933 = vmatmul.mubr.f32.gmra.mrb[0].mxu0 %v2635
  %v2934 = vpop.f32.mrb[0].mxu0
  %v2935 = vadd.f32 %v2568, %v2934
  %v2936 = vpop.f32.mrb[0].mxu0
  %2937 = vmatprep.mubr.f32.mxu0 0.0
  %2938 = vmatmul.mubr.f32.gmra.mrb[0].mxu0 %v2638
  %v2939 = vpop.f32.mrb[0].mxu0
  %v2940 = vadd.f32 %v2568, %v2939
  %v2941 = vpop.f32.mrb[0].mxu0
  %2942 = vmatprep.mubr.f32.mxu0 0.0
  %2943 = vmatmul.mubr.f32.gmra.mrb[0].mxu0 %v2641
  %v2944 = vpop.f32.mrb[0].mxu0
  %v2945 = vadd.f32 %v2568, %v2944
  %v2946 = vpop.f32.mrb[0].mxu0
  %2947 = vmatprep.mubr.f32.mxu0 0.0
  %2948 = vmatmul.mubr.f32.gmra.mrb[0].mxu0 %v2644
  %v2949 = vpop.f32.mrb[0].mxu0
  %v2950 = vadd.f32 %v2568, %v2949
  %v2951 = vpop.f32.mrb[0].mxu0
  %2952 = vmatprep.mubr.f32.mxu0 0.0
  %2953 = vmatmul.mubr.f32.gmra.mrb[0].mxu0 %v2647
  %v2954 = vpop.f32.mrb[0].mxu0
  %v2955 = vadd.f32 %v2568, %v2954
  %v2956 = vpop.f32.mrb[0].mxu0
  %2957 = vmatprep.mubr.f32.mxu0 0.0
  %2958 = vmatmul.mubr.f32.gmra.mrb[0].mxu0 %v2650
  %v2959 = vpop.f32.mrb[0].mxu0
  %v2960 = vadd.f32 %v2568, %v2959
  %v2961 = vpop.f32.mrb[0].mxu0
  %2962 = vmatprep.mubr.f32.mxu0 0.0
  %2963 = vmatmul.mubr.f32.gmra.mrb[0].mxu0 %v2653
  %v2964 = vpop.f32.mrb[0].mxu0
  %v2965 = vadd.f32 %v2568, %v2964
  %v2966 = vpop.f32.mrb[0].mxu0
  %2967 = vmatprep.mubr.f32.mxu0 0.0
  %2968 = vmatmul.mubr.f32.gmra.mrb[0].mxu0 %v2656
  %v2969 = vpop.f32.mrb[0].mxu0
  %v2970 = vadd.f32 %v2568, %v2969
  %v2971 = vpop.f32.mrb[0].mxu0
  %2972 = vmatprep.mubr.f32.mxu0 0.0
  %2973 = vmatmul.mubr.f32.gmra.mrb[0].mxu0 %v2659
  %v2974 = vpop.f32.mrb[0].mxu0
  %v2975 = vadd.f32 %v2568, %v2974
  %v2976 = vpop.f32.mrb[0].mxu0
  %2977 = vmatprep.mubr.f32.mxu0 0.0
  %2978 = vmatmul.mubr.f32.gmra.mrb[0].mxu0 %v2662
  %v2979 = vpop.f32.mrb[0].mxu0
  %v2980 = vadd.f32 %v2568, %v2979
  %v2981 = vpop.f32.mrb[0].mxu0
  %2982 = vmatprep.mubr.f32.mxu0 0.0
  %2983 = vmatmul.mubr.f32.gmra.mrb[0].mxu0 %v2665
  %v2984 = vpop.f32.mrb[0].mxu0
  %v2985 = vadd.f32 %v2568, %v2984
  %v2986 = vpop.f32.mrb[0].mxu0
  %2987 = vmatprep.mubr.f32.mxu0 0.0
  %2988 = vmatmul.mubr.f32.gmra.mrb[0].mxu0 %v2668
  %v2989 = vpop.f32.mrb[0].mxu0
  %v2990 = vadd.f32 %v2568, %v2989
  %v2991 = vpop.f32.mrb[0].mxu0
  %2992 = vmatprep.mubr.f32.mxu0 0.0
  %2993 = vmatmul.mubr.f32.gmra.mrb[0].mxu0 %v2671
  %v2994 = vpop.f32.mrb[0].mxu0
  %v2995 = vadd.f32 %v2568, %v2994
  %v2996 = vpop.f32.mrb[0].mxu0
  %2997 = vmatprep.mubr.f32.mxu0 0.0
  %2998 = vmatmul.mubr.f32.gmra.mrb[0].mxu0 %v2674
  %v2999 = vpop.f32.mrb[0].mxu0
  %v3000 = vadd.f32 %v2568, %v2999
  %v3001 = vpop.f32.mrb[0].mxu0
  %3002 = vmatprep.mubr.f32.mxu0 0.0
  %3003 = vmatmul.mubr.f32.gmra.mrb[0].mxu0 %v2677
  %v3004 = vpop.f32.mrb[0].mxu0
  %v3005 = vadd.f32 %v2568, %v3004
  %v3006 = vpop.f32.mrb[0].mxu0
  %3007 = vmatprep.mubr.f32.mxu0 0.0
  %3008 = vmatmul.mubr.f32.gmra.mrb[0].mxu0 %v2680
  %v3009 = vpop.f32.mrb[0].mxu0
  %v3010 = vadd.f32 %v2568, %v3009
  %v3011 = vpop.f32.mrb[0].mxu0
  %3012 = vmatprep.mubr.f32.mxu0 0.0
  %3013 = vmatmul.mubr.f32.gmra.mrb[0].mxu0 %v2683
  %v3014 = vpop.f32.mrb[0].mxu0
  %v3015 = vadd.f32 %v2568, %v3014
  %v3016 = vpop.f32.mrb[0].mxu0
  %3017 = vmatprep.mubr.f32.mxu0 0.0
  %3018 = vmatmul.mubr.f32.gmra.mrb[0].mxu0 %v2686
  %v3019 = vpop.f32.mrb[0].mxu0
  %v3020 = vadd.f32 %v2568, %v3019
  %v3021 = vpop.f32.mrb[0].mxu0
  %3022 = vmatprep.mubr.f32.mxu0 0.0
  %3023 = vmatmul.mubr.f32.gmra.mrb[0].mxu0 %v2689
  %v3024 = vpop.f32.mrb[0].mxu0
  %v3025 = vadd.f32 %v2568, %v3024
  %v3026 = vpop.f32.mrb[0].mxu0
  %3027 = vmatprep.mubr.f32.mxu0 0.0
  %3028 = vmatmul.mubr.f32.gmra.mrb[0].mxu0 %v2692
  %v3029 = vpop.f32.mrb[0].mxu0
  %v3030 = vadd.f32 %v2568, %v3029
  %v3031 = vpop.f32.mrb[0].mxu0
  %3032 = vmatprep.mubr.f32.mxu0 0.0
  %3033 = vmatmul.mubr.f32.gmra.mrb[0].mxu0 %v2695
  %v3034 = vpop.f32.mrb[0].mxu0
  %v3035 = vadd.f32 %v2568, %v3034
  %v3036 = vpop.f32.mrb[0].mxu0
  %3037 = vmatprep.mubr.f32.mxu0 0.0
  %3038 = vmatmul.mubr.f32.gmra.mrb[0].mxu0 %v2698
  %v3039 = vpop.f32.mrb[0].mxu0
  %v3040 = vadd.f32 %v2568, %v3039
  %v3041 = vpop.f32.mrb[0].mxu0
  %3042 = vmatprep.mubr.f32.mxu0 0.0
  %3043 = vmatmul.mubr.f32.gmra.mrb[0].mxu0 %v2701
  %v3044 = vpop.f32.mrb[0].mxu0
  %v3045 = vadd.f32 %v2568, %v3044
  %v3046 = vpop.f32.mrb[0].mxu0
  %3047 = vmatprep.mubr.f32.mxu0 0.0
  %3048 = vmatmul.mubr.f32.gmra.mrb[0].mxu0 %v2704
  %v3049 = vpop.f32.mrb[0].mxu0
  %v3050 = vadd.f32 %v2568, %v3049
  %v3051 = vpop.f32.mrb[0].mxu0
  %3052 = vmatprep.mubr.f32.mxu0 0.0
  %3053 = vmatmul.mubr.f32.gmra.mrb[0].mxu0 %v2707
  %v3054 = vpop.f32.mrb[0].mxu0
  %v3055 = vadd.f32 %v2568, %v3054
  %v3056 = vpop.f32.mrb[0].mxu0
  %3057 = vmatprep.mubr.f32.mxu0 0.0
  %3058 = vmatmul.mubr.f32.gmra.mrb[0].mxu0 %v2710
  %v3059 = vpop.f32.mrb[0].mxu0
  %v3060 = vadd.f32 %v2568, %v3059
  %v3061 = vpop.f32.mrb[0].mxu0
  %3062 = vmatprep.mubr.f32.mxu0 0.0
  %3063 = vmatmul.mubr.f32.gmra.mrb[0].mxu0 %v2713
  %v3064 = vpop.f32.mrb[0].mxu0
  %v3065 = vadd.f32 %v2568, %v3064
  %v3066 = vpop.f32.mrb[0].mxu0
  %3067 = vmatprep.mubr.f32.mxu0 0.0
  %3068 = vmatmul.mubr.f32.gmra.mrb[0].mxu0 %v2716
  %v3069 = vpop.f32.mrb[0].mxu0
  %v3070 = vadd.f32 %v2568, %v3069
  %v3071 = vpop.f32.mrb[0].mxu0
  %3072 = vmatprep.mubr.f32.mxu0 0.0
  %3073 = vmatmul.mubr.f32.gmra.mrb[0].mxu0 %v2719
  %v3074 = vpop.f32.mrb[0].mxu0
  %v3075 = vadd.f32 %v2568, %v3074
  %v3076 = vpop.f32.mrb[0].mxu0
  %3077 = vmatprep.mubr.f32.mxu0 0.0
  %3078 = vmatmul.mubr.f32.gmra.mrb[0].mxu0 %v2722
  %v3079 = vpop.f32.mrb[0].mxu0
  %v3080 = vadd.f32 %v2568, %v3079
  %v3081 = vpop.f32.mrb[0].mxu0
  %3082 = vmatprep.mubr.f32.mxu0 0.0
  %3083 = vmatmul.mubr.f32.gmra.mrb[0].mxu0 %v2725
  %v3084 = vpop.f32.mrb[0].mxu0
  %v3085 = vadd.f32 %v2568, %v3084
  %v3086 = vpop.f32.mrb[0].mxu0
  %3087 = vmatprep.mubr.f32.mxu0 0.0
  %3088 = vmatmul.mubr.f32.gmra.mrb[0].mxu0 %v2728
  %v3089 = vpop.f32.mrb[0].mxu0
  %v3090 = vadd.f32 %v2568, %v3089
  %v3091 = vpop.f32.mrb[0].mxu0
  %3092 = vmatprep.mubr.f32.mxu0 0.0
  %3093 = vmatmul.mubr.f32.gmra.mrb[0].mxu0 %v2731
  %v3094 = vpop.f32.mrb[0].mxu0
  %v3095 = vadd.f32 %v2568, %v3094
  %v3096 = vpop.f32.mrb[0].mxu0
  %3097 = vmatprep.mubr.f32.mxu0 0.0
  %3098 = vmatmul.mubr.f32.gmra.mrb[0].mxu0 %v2734
  %v3099 = vpop.f32.mrb[0].mxu0
  %v3100 = vadd.f32 %v2568, %v3099
  %v3101 = vpop.f32.mrb[0].mxu0
  %3102 = vmatprep.mubr.f32.mxu0 0.0
  %3103 = vmatmul.mubr.f32.gmra.mrb[0].mxu0 %v2737
  %v3104 = vpop.f32.mrb[0].mxu0
  %v3105 = vadd.f32 %v2568, %v3104
  %v3106 = vpop.f32.mrb[0].mxu0
  %3107 = vmatprep.mubr.f32.mxu0 0.0
  %3108 = vmatmul.mubr.f32.gmra.mrb[0].mxu0 %v2740
  %v3109 = vpop.f32.mrb[0].mxu0
  %v3110 = vadd.f32 %v2568, %v3109
  %v3111 = vpop.f32.mrb[0].mxu0
  %3112 = vmatprep.mubr.f32.mxu0 0.0
  %3113 = vmatmul.mubr.f32.gmra.mrb[0].mxu0 %v2743
  %v3114 = vpop.f32.mrb[0].mxu0
  %v3115 = vadd.f32 %v2568, %v3114
  %v3116 = vpop.f32.mrb[0].mxu0
  %3117 = vmatprep.mubr.f32.mxu0 0.0
  %3118 = vmatmul.mubr.f32.gmra.mrb[0].mxu0 %v2746
  %v3119 = vpop.f32.mrb[0].mxu0
  %v3120 = vadd.f32 %v2568, %v3119
  %v3121 = vpop.f32.mrb[0].mxu0
  %3122 = vmatprep.mubr.f32.mxu0 0.0
  %3123 = vmatmul.mubr.f32.gmra.mrb[0].mxu0 %v2749
  %v3124 = vpop.f32.mrb[0].mxu0
  %v3125 = vadd.f32 %v2568, %v3124
  %v3126 = vpop.f32.mrb[0].mxu0
  %3127 = vmatprep.mubr.f32.mxu0 0.0
  %3128 = vmatmul.mubr.f32.gmra.mrb[0].mxu0 %v2752
  %v3129 = vpop.f32.mrb[0].mxu0
  %v3130 = vadd.f32 %v2568, %v3129
  %v3131 = vpop.f32.mrb[0].mxu0
  %3132 = vmatprep.mubr.f32.mxu0 0.0
  %3133 = vmatmul.mubr.f32.gmra.mrb[0].mxu0 %v2755
  %v3134 = vpop.f32.mrb[0].mxu0
  %v3135 = vadd.f32 %v2568, %v3134
  %v3136 = vpop.f32.mrb[0].mxu0
  %3137 = vmatprep.mubr.f32.mxu0 0.0
  %3138 = vmatmul.mubr.f32.gmra.mrb[0].mxu0 %v2758
  %v3139 = vpop.f32.mrb[0].mxu0
  %v3140 = vadd.f32 %v2568, %v3139
  %v3141 = vpop.f32.mrb[0].mxu0
  %3142 = vmatprep.mubr.f32.mxu0 0.0
  %3143 = vmatmul.mubr.f32.gmra.mrb[0].mxu0 %v2761
  %v3144 = vpop.f32.mrb[0].mxu0
  %v3145 = vadd.f32 %v2568, %v3144
  %v3146 = vpop.f32.mrb[0].mxu0
  %3147 = vdwg.mxu0
  %v3148 = vmax.f32 %v2830, 0.0
  %v3149 = vmax.f32 %v2835, 0.0
  %v3150 = vmax.f32 %v2840, 0.0
  %v3151 = vmax.f32 %v2845, 0.0
  %v3152 = vmax.f32 %v2850, 0.0
  %v3153 = vmax.f32 %v2855, 0.0
  %v3154 = vmax.f32 %v2860, 0.0
  %v3155 = vmax.f32 %v2865, 0.0
  %v3156 = vmax.f32 %v2870, 0.0
  %v3157 = vmax.f32 %v2875, 0.0
  %v3158 = vmax.f32 %v2880, 0.0
  %v3159 = vmax.f32 %v2885, 0.0
  %v3160 = vmax.f32 %v2890, 0.0
  %v3161 = vmax.f32 %v2895, 0.0
  %v3162 = vmax.f32 %v2900, 0.0
  %v3163 = vmax.f32 %v2905, 0.0
  %v3164 = vmax.f32 %v2910, 0.0
  %v3165 = vmax.f32 %v2915, 0.0
  %v3166 = vmax.f32 %v2920, 0.0
  %v3167 = vmax.f32 %v2925, 0.0
  %v3168 = vmax.f32 %v2930, 0.0
  %v3169 = vmax.f32 %v2935, 0.0
  %v3170 = vmax.f32 %v2940, 0.0
  %v3171 = vmax.f32 %v2945, 0.0
  %v3172 = vmax.f32 %v2950, 0.0
  %v3173 = vmax.f32 %v2955, 0.0
  %v3174 = vmax.f32 %v2960, 0.0
  %v3175 = vmax.f32 %v2965, 0.0
  %v3176 = vmax.f32 %v2970, 0.0
  %v3177 = vmax.f32 %v2975, 0.0
  %v3178 = vmax.f32 %v2980, 0.0
  %v3179 = vmax.f32 %v2985, 0.0
  %v3180 = vmax.f32 %v2990, 0.0
  %v3181 = vmax.f32 %v2995, 0.0
  %v3182 = vmax.f32 %v3000, 0.0
  %v3183 = vmax.f32 %v3005, 0.0
  %v3184 = vmax.f32 %v3010, 0.0
  %v3185 = vmax.f32 %v3015, 0.0
  %v3186 = vmax.f32 %v3020, 0.0
  %v3187 = vmax.f32 %v3025, 0.0
  %v3188 = vmax.f32 %v3030, 0.0
  %v3189 = vmax.f32 %v3035, 0.0
  %v3190 = vmax.f32 %v3040, 0.0
  %v3191 = vmax.f32 %v3045, 0.0
  %v3192 = vmax.f32 %v3050, 0.0
  %v3193 = vmax.f32 %v3055, 0.0
  %v3194 = vmax.f32 %v3060, 0.0
  %v3195 = vmax.f32 %v3065, 0.0
  %v3196 = vmax.f32 %v3070, 0.0
  %v3197 = vmax.f32 %v3075, 0.0
  %v3198 = vmax.f32 %v3080, 0.0
  %v3199 = vmax.f32 %v3085, 0.0
  %v3200 = vmax.f32 %v3090, 0.0
  %v3201 = vmax.f32 %v3095, 0.0
  %v3202 = vmax.f32 %v3100, 0.0
  %v3203 = vmax.f32 %v3105, 0.0
  %v3204 = vmax.f32 %v3110, 0.0
  %v3205 = vmax.f32 %v3115, 0.0
  %v3206 = vmax.f32 %v3120, 0.0
  %v3207 = vmax.f32 %v3125, 0.0
  %v3208 = vmax.f32 %v3130, 0.0
  %v3209 = vmax.f32 %v3135, 0.0
  %v3210 = vmax.f32 %v3140, 0.0
  %v3211 = vmax.f32 %v3145, 0.0
  %3212 = vst.msk [vmem:[%s7] sm:$0xff] %vm2486, %v3148
  %3213 = vst.msk [vmem:[%s7 + $0x8] sm:$0xff] %vm2486, %v3149
  %3214 = vst.msk [vmem:[%s7 + $0x10] sm:$0xff] %vm2486, %v3150
  %3215 = vst.msk [vmem:[%s7 + $0x18] sm:$0xff] %vm2486, %v3151
  %3216 = vst.msk [vmem:[%s7 + $0x20] sm:$0xff] %vm2486, %v3152
  %3217 = vst.msk [vmem:[%s7 + $0x28] sm:$0xff] %vm2486, %v3153
  %3218 = vst.msk [vmem:[%s7 + $0x30] sm:$0xff] %vm2486, %v3154
  %3219 = vst.msk [vmem:[%s7 + $0x38] sm:$0xff] %vm2486, %v3155
  %3220 = vst.msk [vmem:[%s7 + $0x40] sm:$0xff] %vm2486, %v3156
  %3221 = vst.msk [vmem:[%s7 + $0x48] sm:$0xff] %vm2486, %v3157
  %3222 = vst.msk [vmem:[%s7 + $0x50] sm:$0xff] %vm2486, %v3158
  %3223 = vst.msk [vmem:[%s7 + $0x58] sm:$0xff] %vm2486, %v3159
  %3224 = vst.msk [vmem:[%s7 + $0x60] sm:$0xff] %vm2486, %v3160
  %3225 = vst.msk [vmem:[%s7 + $0x68] sm:$0xff] %vm2486, %v3161
  %3226 = vst.msk [vmem:[%s7 + $0x70] sm:$0xff] %vm2486, %v3162
  %3227 = vst.msk [vmem:[%s7 + $0x78] sm:$0xff] %vm2486, %v3163
  %3228 = vst.msk [vmem:[%s7 + $0x80] sm:$0xff] %vm2486, %v3164
  %3229 = vst.msk [vmem:[%s7 + $0x88] sm:$0xff] %vm2486, %v3165
  %3230 = vst.msk [vmem:[%s7 + $0x90] sm:$0xff] %vm2486, %v3166
  %3231 = vst.msk [vmem:[%s7 + $0x98] sm:$0xff] %vm2486, %v3167
  %3232 = vst.msk [vmem:[%s7 + $0xa0] sm:$0xff] %vm2486, %v3168
  %3233 = vst.msk [vmem:[%s7 + $0xa8] sm:$0xff] %vm2486, %v3169
  %3234 = vst.msk [vmem:[%s7 + $0xb0] sm:$0xff] %vm2486, %v3170
  %3235 = vst.msk [vmem:[%s7 + $0xb8] sm:$0xff] %vm2486, %v3171
  %3236 = vst.msk [vmem:[%s7 + $0xc0] sm:$0xff] %vm2486, %v3172
  %3237 = vst.msk [vmem:[%s7 + $0xc8] sm:$0xff] %vm2486, %v3173
  %3238 = vst.msk [vmem:[%s7 + $0xd0] sm:$0xff] %vm2486, %v3174
  %3239 = vst.msk [vmem:[%s7 + $0xd8] sm:$0xff] %vm2486, %v3175
  %3240 = vst.msk [vmem:[%s7 + $0xe0] sm:$0xff] %vm2486, %v3176
  %3241 = vst.msk [vmem:[%s7 + $0xe8] sm:$0xff] %vm2486, %v3177
  %3242 = vst.msk [vmem:[%s7 + $0xf0] sm:$0xff] %vm2486, %v3178
  %3243 = vst.msk [vmem:[%s7 + $0xf8] sm:$0xff] %vm2486, %v3179
  %3244 = vst.msk [vmem:[%s7 + $0x100] sm:$0xff] %vm2486, %v3180
  %3245 = vst.msk [vmem:[%s7 + $0x108] sm:$0xff] %vm2486, %v3181
  %3246 = vst.msk [vmem:[%s7 + $0x110] sm:$0xff] %vm2486, %v3182
  %3247 = vst.msk [vmem:[%s7 + $0x118] sm:$0xff] %vm2486, %v3183
  %3248 = vst.msk [vmem:[%s7 + $0x120] sm:$0xff] %vm2486, %v3184
  %3249 = vst.msk [vmem:[%s7 + $0x128] sm:$0xff] %vm2486, %v3185
  %3250 = vst.msk [vmem:[%s7 + $0x130] sm:$0xff] %vm2486, %v3186
  %3251 = vst.msk [vmem:[%s7 + $0x138] sm:$0xff] %vm2486, %v3187
  %3252 = vst.msk [vmem:[%s7 + $0x140] sm:$0xff] %vm2486, %v3188
  %3253 = vst.msk [vmem:[%s7 + $0x148] sm:$0xff] %vm2486, %v3189
  %3254 = vst.msk [vmem:[%s7 + $0x150] sm:$0xff] %vm2486, %v3190
  %3255 = vst.msk [vmem:[%s7 + $0x158] sm:$0xff] %vm2486, %v3191
  %3256 = vst.msk [vmem:[%s7 + $0x160] sm:$0xff] %vm2486, %v3192
  %3257 = vst.msk [vmem:[%s7 + $0x168] sm:$0xff] %vm2486, %v3193
  %3258 = vst.msk [vmem:[%s7 + $0x170] sm:$0xff] %vm2486, %v3194
  %3259 = vst.msk [vmem:[%s7 + $0x178] sm:$0xff] %vm2486, %v3195
  %3260 = vst.msk [vmem:[%s7 + $0x180] sm:$0xff] %vm2486, %v3196
  %3261 = vst.msk [vmem:[%s7 + $0x188] sm:$0xff] %vm2486, %v3197
  %3262 = vst.msk [vmem:[%s7 + $0x190] sm:$0xff] %vm2486, %v3198
  %3263 = vst.msk [vmem:[%s7 + $0x198] sm:$0xff] %vm2486, %v3199
  %3264 = vst.msk [vmem:[%s7 + $0x1a0] sm:$0xff] %vm2486, %v3200
  %3265 = vst.msk [vmem:[%s7 + $0x1a8] sm:$0xff] %vm2486, %v3201
  %3266 = vst.msk [vmem:[%s7 + $0x1b0] sm:$0xff] %vm2486, %v3202
  %3267 = vst.msk [vmem:[%s7 + $0x1b8] sm:$0xff] %vm2486, %v3203
  %3268 = vst.msk [vmem:[%s7 + $0x1c0] sm:$0xff] %vm2486, %v3204
  %3269 = vst.msk [vmem:[%s7 + $0x1c8] sm:$0xff] %vm2486, %v3205
  %3270 = vst.msk [vmem:[%s7 + $0x1d0] sm:$0xff] %vm2486, %v3206
  %3271 = vst.msk [vmem:[%s7 + $0x1d8] sm:$0xff] %vm2486, %v3207
  %3272 = vst.msk [vmem:[%s7 + $0x1e0] sm:$0xff] %vm2486, %v3208
  %3273 = vst.msk [vmem:[%s7 + $0x1e8] sm:$0xff] %vm2486, %v3209
  %3274 = vst.msk [vmem:[%s7 + $0x1f0] sm:$0xff] %vm2486, %v3210
  %3275 = vst.msk [vmem:[%s7 + $0x1f8] sm:$0xff] %vm2486, %v3211
  // Predicated region
  $region30: #{tpu_custom_call.1} parent=0 // pred_check
    _
  $region31: #{tpu_custom_call.1} parent=0 // pred_check_branch
    %3277 = sbr.rel (0) target = $region33
  $region32: #{tpu_custom_call.1} parent=0 // pred_region
    _
  $region33: #{tpu_custom_call.1} parent=0 // pred_fallthru
    _
  // Predicated region
  $region34: #{tpu_custom_call.1} parent=0 // pred_check
    _
  $region35: #{tpu_custom_call.1} parent=0 // pred_check_branch
    %3279 = sbr.rel (0) target = $region37
  $region36: #{tpu_custom_call.1} parent=0 // pred_region
    _
  $region37: #{tpu_custom_call.1} parent=0 // pred_fallthru
    _

</llo_original>
